<compile_context>
chip_gen: v5e
topology: v5e:2x2
jax: 0.10.0
libtpu: 0.0.40
codegen_flags: <defaults>
</compile_context>

<pallas_src>
import functools

import jax
import jax.numpy as jnp
from jax.experimental import pallas as pl
from jax.experimental.pallas import tpu as pltpu

# ---------------------------- configuration ----------------------------------
LAGS = 2            # self.L
LATENT = 4          # latent_size == input_dim
EMBED_DIM = 8       # embedding_dim
HIDDEN = 64         # hidden_dim
SLOPE = 0.2         # LeakyReLU negative slope used by NLayerLeakyMLP
BATCH = 2
LENGTH = 10

D_IN = HIDDEN + LAGS * LATENT + 1      # per-latent gs input features (73)
GH = LATENT * HIDDEN                   # 256: all gs hidden units packed along lanes
TAIL = LAGS * LATENT + LATENT          # 12 = yy(8) + xx(4)
TAIL_PAD = 16                          # pad tail features to a sublane multiple
OUT_PAD = 128                          # lane-dense output width
ROW_TILE = 512                         # default rows per grid step (multiple of 16)


def _round_up(a, b):
    return ((a + b - 1) // b) * b


def _leaky(x):
    return jnp.where(x > 0, x, SLOPE * x)


# ------------------------------ fused kernel ----------------------------------
def fused_kernel(emb_ref, tail_ref,
                 fw1_ref, fb1_ref, fw2_ref, fb2_ref,
                 w1e_ref, w1t_ref, b1_ref, tseed_ref,
                 w2_ref, b2_ref, w3_ref, b3_ref,
                 wout_ref, bout_ref,
                 out_ref, s_ref, *, tile, n_valid):
    f32 = jnp.float32
    bf16 = jnp.bfloat16

    # ---- self.fc layers 1-2 (layer 3 folded into w1e/b1 at pack time) -------
    h = jnp.dot(emb_ref[...], fw1_ref[...], preferred_element_type=f32) + fb1_ref[...]
    h = _leaky(h)
    h = jnp.dot(h.astype(bf16), fw2_ref[...], preferred_element_type=f32) + fb2_ref[...]
    h = _leaky(h)                                                  # (tile, H) f32

    # ---- gs layer 1: all LATENT MLPs packed along lanes (width 4*H) ---------
    pre1 = (jnp.dot(h.astype(bf16), w1e_ref[...], preferred_element_type=f32)
            + jnp.dot(tail_ref[...], w1t_ref[...], preferred_element_type=f32)
            + b1_ref[...])                                         # (tile, GH) f32
    pos = pre1 > 0
    # Stacked forward (rows 0:tile) + forward-mode tangent (rows tile:2*tile),
    # stored into a persistent bf16 VMEM scratch (no per-layer concat copies).
    s_ref[:tile, :] = jnp.where(pos, pre1, SLOPE * pre1).astype(bf16)
    s_ref[tile:, :] = (jnp.where(pos, 1.0, SLOPE) * tseed_ref[...]).astype(bf16)

    # ---- gs layers 2 & 3: one block-diagonal MXU dot per layer ---------------
    for w_ref, b_ref in ((w2_ref, b2_ref), (w3_ref, b3_ref)):
        p = jnp.dot(s_ref[...], w_ref[...], preferred_element_type=f32)  # (2*tile, GH)
        pre = p[:tile] + b_ref[...]
        pos = pre > 0
        s_ref[:tile, :] = jnp.where(pos, pre, SLOPE * pre).astype(bf16)
        s_ref[tile:, :] = (jnp.where(pos, 1.0, SLOPE) * p[tile:]).astype(bf16)

    # ---- final projection + in-kernel per-row log|det| reduction -------------
    p = jnp.dot(s_ref[...], wout_ref[...], preferred_element_type=f32)   # (2*tile, 128)
    res = p[:tile] + bout_ref[...]            # residual_j lives in column j (j < LATENT)
    deriv = p[tile:]                          # d residual_j / d x_j lives in column j

    col = jax.lax.broadcasted_iota(jnp.int32, res.shape, 1)
    lat = col < LATENT
    # clamp before log: zero lanes / padded rows stay finite (no -inf leaks)
    logabs = jnp.log(jnp.maximum(jnp.abs(deriv), 1e-30))
    logdet_row = jnp.sum(jnp.where(lat, logabs, 0.0), axis=-1, keepdims=True)  # (tile, 1)

    out = jnp.where(lat, res, 0.0)
    out = jnp.where(col == LATENT, logdet_row, out)      # per-row logdet in lane LATENT
    row = jax.lax.broadcasted_iota(jnp.int32, res.shape, 0) + pl.program_id(0) * tile
    out_ref[...] = jnp.where(row < n_valid, out, 0.0).astype(out_ref.dtype)


def _run_fused(emb, tail, weights, *, tile, n_pad, n_valid):
    kernel = functools.partial(fused_kernel, tile=tile, n_valid=n_valid)
    grid = (n_pad // tile,)

    def row_spec(block):
        return pl.BlockSpec(block, lambda i: (i, 0))

    def const_spec(arr):
        # constant block index -> DMA'd once, stays VMEM-resident across grid steps
        return pl.BlockSpec(arr.shape, lambda i: (0, 0))

    in_specs = [row_spec((tile, emb.shape[1])), row_spec((tile, TAIL_PAD))]
    in_specs += [const_spec(w) for w in weights]

    return pl.pallas_call(
        kernel,
        grid=grid,
        in_specs=in_specs,
        out_specs=pl.BlockSpec((tile, OUT_PAD), lambda i: (i, 0)),
        out_shape=jax.ShapeDtypeStruct((n_pad, OUT_PAD), jnp.bfloat16),
        scratch_shapes=[pltpu.VMEM((2 * tile, GH), jnp.bfloat16)],
        compiler_params=pltpu.CompilerParams(
            dimension_semantics=("parallel",),          # megacore split on v7x
            vmem_limit_bytes=48 * 1024 * 1024,          # safe under v7x's 64 MiB
        ),
    )(emb, tail, *weights)


# ------------------------------ full forward -----------------------------------
def np_change_transition_prior(x, embeddings, weights, *, row_tile=ROW_TILE):
    # TODO(synk): masks != None branch of the PyTorch forward is not implemented
    # (default masks=None path only).
    B, T, D = x.shape
    N = B * (T - LAGS)
    tile = min(row_tile, _round_up(N, 16))     # multiple of 16 (bf16 sublane packing)
    n_pad = _round_up(N, tile)

    emb = jnp.pad(embeddings, ((0, n_pad - N), (0, 0))).astype(jnp.bfloat16)

    # torch.unfold(dim=1, size=L+1, step=1) + swapaxes(2,3) + reshape
    xu = jnp.stack([x[:, l:l + (T - LAGS), :] for l in range(LAGS + 1)], axis=2)
    xu = xu.reshape(N, LAGS + 1, D)
    xx = xu[:, -1, :]                             # (N, D)     current step
    yy = xu[:, :-1, :].reshape(N, LAGS * D)       # (N, L*D)   lagged steps
    tail = jnp.concatenate([yy, xx], axis=-1)     # (N, 12)
    tail = jnp.pad(tail, ((0, n_pad - N), (0, TAIL_PAD - TAIL))).astype(jnp.bfloat16)

    out = _run_fused(emb, tail, weights, tile=tile, n_pad=n_pad, n_valid=N)

    out = out[:N].astype(jnp.float32)
    residuals = out[:, :LATENT].reshape(B, T - LAGS, D)
    sum_log_abs_det = jnp.sum(out[:, LATENT].reshape(B, T - LAGS), axis=1)
    return residuals, sum_log_abs_det


# ------------------------------ parameters --------------------------------------
def make_params(key):
    ks = jax.random.split(key, 14)
    # fc: Linear(E,H) LReLU Linear(H,H) LReLU Linear(H,H)
    fW1 = 0.1 * jax.random.normal(ks[0], (EMBED_DIM, HIDDEN), jnp.float32)
    fb1 = 0.01 * jax.random.normal(ks[1], (1, HIDDEN), jnp.float32)
    fW2 = 0.1 * jax.random.normal(ks[2], (HIDDEN, HIDDEN), jnp.float32)
    fb2 = 0.01 * jax.random.normal(ks[3], (1, HIDDEN), jnp.float32)
    fW3 = 0.1 * jax.random.normal(ks[4], (HIDDEN, HIDDEN), jnp.float32)
    fb3 = 0.01 * jax.random.normal(ks[5], (1, HIDDEN), jnp.float32)
    fc_params = (fW1, fb1, fW2, fb2, fW3, fb3)

    # gs[i]: Linear(D_IN,H) LReLU x3 then Linear(H,1); stacked over latent index
    gW1 = 0.1 * jax.random.normal(ks[6], (LATENT, D_IN, HIDDEN), jnp.float32)
    gb1 = 0.01 * jax.random.normal(ks[7], (LATENT, 1, HIDDEN), jnp.float32)
    gW2 = 0.1 * jax.random.normal(ks[8], (LATENT, HIDDEN, HIDDEN), jnp.float32)
    gb2 = 0.01 * jax.random.normal(ks[9], (LATENT, 1, HIDDEN), jnp.float32)
    gW3 = 0.1 * jax.random.normal(ks[10], (LATENT, HIDDEN, HIDDEN), jnp.float32)
    gb3 = 0.01 * jax.random.normal(ks[11], (LATENT, 1, HIDDEN), jnp.float32)
    gWo = 0.1 * jax.random.normal(ks[12], (LATENT, 1, HIDDEN), jnp.float32)
    gbo = 0.01 * jax.random.normal(ks[13], (LATENT, 1, 1), jnp.float32)
    gs_params = (gW1, gb1, gW2, gb2, gW3, gb3, gWo, gbo)
    return fc_params, gs_params


def pack_kernel_weights(fc_params, gs_params):
    """Pack the 4 gs MLPs into lane-wide / block-diagonal bf16 weights and fold
    fc layer 3 into gs layer 1 (exact: emb_h only feeds gs layer 1 linearly)."""
    fW1, fb1, fW2, fb2, fW3, fb3 = fc_params
    gW1, gb1, gW2, gb2, gW3, gb3, gWo, gbo = gs_params
    H = HIDDEN
    bf16 = jnp.bfloat16

    # layer 1: input layout per latent is [emb_h(64) | yy(8) | x_i(1)]
    w1_emb = jnp.transpose(gW1[:, :H, :], (1, 0, 2)).reshape(H, GH)          # (64, 256)
    w1_yy = jnp.transpose(gW1[:, H:H + LAGS * LATENT, :], (1, 0, 2)).reshape(LAGS * LATENT, GH)
    xrow = gW1[:, -1, :]                                                      # (LATENT, H)
    w1_xx = jnp.zeros((LATENT, GH), jnp.float32)
    for j in range(LATENT):
        w1_xx = w1_xx.at[j, j * H:(j + 1) * H].set(xrow[j])                  # diag placement
    w1_tail = jnp.concatenate(
        [w1_yy, w1_xx, jnp.zeros((TAIL_PAD - TAIL, GH), jnp.float32)], axis=0)  # (16, 256)

    b1 = jnp.transpose(gb1, (1, 0, 2)).reshape(1, GH)
    # fold fc layer 3:  emb_h @ w1_emb  ==  h2 @ (fW3 @ w1_emb) + fb3 @ w1_emb
    w1e_fold = fW3 @ w1_emb                        # (64, 256)
    b1_fold = b1 + fb3 @ w1_emb                    # (1, 256)

    tseed = xrow.reshape(1, GH)                    # layer-1 tangent seed (d pre1 / d x_i)

    b2 = jnp.transpose(gb2, (1, 0, 2)).reshape(1, GH)
    b3 = jnp.transpose(gb3, (1, 0, 2)).reshape(1, GH)
    w2 = jax.scipy.linalg.block_diag(*[gW2[j] for j in range(LATENT)])        # (256, 256)
    w3 = jax.scipy.linalg.block_diag(*[gW3[j] for j in range(LATENT)])        # (256, 256)

    # final projection: only LATENT non-zero columns (residual for forward rows,
    # derivative for tangent rows share the same columns -- they live on
    # different sublane halves).
    wout = jnp.zeros((GH, OUT_PAD), jnp.float32)
    bout = jnp.zeros((1, OUT_PAD), jnp.float32)
    for j in range(LATENT):
        wout = wout.at[j * H:(j + 1) * H, j].set(gWo[j, 0])
        bout = bout.at[0, j].set(gbo[j, 0, 0])

    # bf16 for everything that feeds the MXU; biases / tangent seed stay f32.
    return (fW1.astype(bf16), fb1, fW2.astype(bf16), fb2,
            w1e_fold.astype(bf16), w1_tail.astype(bf16), b1_fold, tseed,
            w2.astype(bf16), b2, w3.astype(bf16), b3,
            wout.astype(bf16), bout)


# ------------------------------ pure-JAX reference -------------------------------
def reference(x, embeddings, fc_params, gs_params):
    fW1, fb1, fW2, fb2, fW3, fb3 = fc_params
    gW1, gb1, gW2, gb2, gW3, gb3, gWo, gbo = gs_params
    B, T, D = x.shape
    N = B * (T - LAGS)

    h = _leaky(embeddings @ fW1 + fb1)
    h = _leaky(h @ fW2 + fb2)
    emb_h = h @ fW3 + fb3

    xu = jnp.stack([x[:, l:l + (T - LAGS), :] for l in range(LAGS + 1)], axis=2)
    xu = xu.reshape(N, LAGS + 1, D)
    xx = xu[:, -1, :]
    yy = xu[:, :-1, :].reshape(N, LAGS * D)

    residuals, logdet_sum = [], jnp.zeros((N,), jnp.float32)
    for i in range(D):
        inp = jnp.concatenate([emb_h, yy, xx[:, i:i + 1]], axis=-1)

        def g(v, i=i):
            h1 = _leaky(v @ gW1[i] + gb1[i, 0])
            h2 = _leaky(h1 @ gW2[i] + gb2[i, 0])
            h3 = _leaky(h2 @ gW3[i] + gb3[i, 0])
            return h3 @ gWo[i, 0] + gbo[i, 0, 0]

        residuals.append(jax.vmap(g)(inp)[:, None])
        jac = jax.vmap(jax.jacfwd(g))(inp)                          # (N, D_IN)
        logdet_sum = logdet_sum + jnp.log(jnp.abs(jac[:, -1]))

    residuals = jnp.concatenate(residuals, axis=-1).reshape(B, T - LAGS, D)
    logdet = jnp.sum(logdet_sum.reshape(B, T - LAGS), axis=1)
    return residuals, logdet


# ----------------------------------- main ----------------------------------------
if __name__ == "__main__":
    key = jax.random.PRNGKey(0)
    kx, ke, kp = jax.random.split(key, 3)
    x = jax.random.normal(kx, (BATCH, LENGTH, LATENT), jnp.float32)
    embeddings = jax.random.normal(ke, (BATCH * (LENGTH - LAGS), EMBED_DIM), jnp.float32)
    fc_params, gs_params = make_params(kp)
    weights = pack_kernel_weights(fc_params, gs_params)

    fwd = jax.jit(np_change_transition_prior)
    residuals, logdet = fwd(x, embeddings, weights)
    jax.block_until_ready((residuals, logdet))

    ref_res, ref_logdet = reference(x, embeddings, fc_params, gs_params)
    assert residuals.shape == (BATCH, LENGTH - LAGS, LATENT)
    assert logdet.shape == (BATCH,)
    # bf16 MXU operands + bf16 output vs a pure-f32 reference: bf16-level tolerance
    # (log|det| is a sum of ~32 log terms through a 4-dot bf16 chain, so small
    # activation-kink differences near zero pre-activations show up as a few
    # tenths on a ~1e2-magnitude sum).
    assert jnp.allclose(residuals, ref_res, atol=2e-2, rtol=2e-2), \
        float(jnp.max(jnp.abs(residuals - ref_res)))
    assert jnp.allclose(logdet, ref_logdet, atol=5e-1, rtol=5e-2), \
        (logdet, ref_logdet)

    print("KERNEL_OK")
</pallas_src>

<mosaic_0001>
module attributes {stable_mosaic.version = 11 : i64} {
  func.func @fused_kernel(%arg0: i32, %arg1: memref<16x8xbf16, #tpu.memory_space<vmem>>, %arg2: memref<16x16xbf16, #tpu.memory_space<vmem>>, %arg3: memref<8x64xbf16, #tpu.memory_space<vmem>>, %arg4: memref<1x64xf32, #tpu.memory_space<vmem>>, %arg5: memref<64x64xbf16, #tpu.memory_space<vmem>>, %arg6: memref<1x64xf32, #tpu.memory_space<vmem>>, %arg7: memref<64x256xbf16, #tpu.memory_space<vmem>>, %arg8: memref<16x256xbf16, #tpu.memory_space<vmem>>, %arg9: memref<1x256xf32, #tpu.memory_space<vmem>>, %arg10: memref<1x256xf32, #tpu.memory_space<vmem>>, %arg11: memref<256x256xbf16, #tpu.memory_space<vmem>>, %arg12: memref<1x256xf32, #tpu.memory_space<vmem>>, %arg13: memref<256x256xbf16, #tpu.memory_space<vmem>>, %arg14: memref<1x256xf32, #tpu.memory_space<vmem>>, %arg15: memref<256x128xbf16, #tpu.memory_space<vmem>>, %arg16: memref<1x128xf32, #tpu.memory_space<vmem>>, %arg17: memref<16x128xbf16, #tpu.memory_space<vmem>>, %arg18: memref<32x256xbf16, #tpu.memory_space<vmem>>) attributes {dimension_semantics = [#tpu.dimension_semantics<parallel>], iteration_bounds = array<i64: 1>, scalar_prefetch = 0 : i64, scratch_operands = 1 : i64, tpu.core_type = #tpu.core_type<tc>, window_params = [{transform_indices = @transform_0, window_bounds = array<i64: 16, 8>}, {transform_indices = @transform_1, window_bounds = array<i64: 16, 16>}, {pipeline_mode = #tpu.pipeline_mode<synchronous>, transform_indices = @transform_2, window_bounds = array<i64: 8, 64>}, {pipeline_mode = #tpu.pipeline_mode<synchronous>, transform_indices = @transform_3, window_bounds = array<i64: 1, 64>}, {pipeline_mode = #tpu.pipeline_mode<synchronous>, transform_indices = @transform_4, window_bounds = array<i64: 64, 64>}, {pipeline_mode = #tpu.pipeline_mode<synchronous>, transform_indices = @transform_5, window_bounds = array<i64: 1, 64>}, {pipeline_mode = #tpu.pipeline_mode<synchronous>, transform_indices = @transform_6, window_bounds = array<i64: 64, 256>}, {pipeline_mode = #tpu.pipeline_mode<synchronous>, transform_indices = @transform_7, window_bounds = array<i64: 16, 256>}, {pipeline_mode = #tpu.pipeline_mode<synchronous>, transform_indices = @transform_8, window_bounds = array<i64: 1, 256>}, {pipeline_mode = #tpu.pipeline_mode<synchronous>, transform_indices = @transform_9, window_bounds = array<i64: 1, 256>}, {pipeline_mode = #tpu.pipeline_mode<synchronous>, transform_indices = @transform_10, window_bounds = array<i64: 256, 256>}, {pipeline_mode = #tpu.pipeline_mode<synchronous>, transform_indices = @transform_11, window_bounds = array<i64: 1, 256>}, {pipeline_mode = #tpu.pipeline_mode<synchronous>, transform_indices = @transform_12, window_bounds = array<i64: 256, 256>}, {pipeline_mode = #tpu.pipeline_mode<synchronous>, transform_indices = @transform_13, window_bounds = array<i64: 1, 256>}, {pipeline_mode = #tpu.pipeline_mode<synchronous>, transform_indices = @transform_14, window_bounds = array<i64: 256, 128>}, {pipeline_mode = #tpu.pipeline_mode<synchronous>, transform_indices = @transform_15, window_bounds = array<i64: 1, 128>}, {transform_indices = @transform_16, window_bounds = array<i64: 16, 128>}]} {
    %c0 = arith.constant 0 : index
    %c0_0 = arith.constant 0 : index
    %0 = vector.load %arg1[%c0, %c0_0] : memref<16x8xbf16, #tpu.memory_space<vmem>>, vector<16x8xbf16>
    %c0_1 = arith.constant 0 : index
    %c0_2 = arith.constant 0 : index
    %1 = vector.load %arg3[%c0_1, %c0_2] : memref<8x64xbf16, #tpu.memory_space<vmem>>, vector<8x64xbf16>
    %cst = arith.constant dense<0.000000e+00> : vector<16x64xf32>
    %2 = tpu.matmul %0, %1, %cst {dimension_numbers = #tpu.dot_dimension_numbers<[1], [0], [0], [1], [0, 0, 1, 1], [], []>} : vector<16x8xbf16>, vector<8x64xbf16>, vector<16x64xf32> -> vector<16x64xf32>
    %c0_3 = arith.constant 0 : index
    %c0_4 = arith.constant 0 : index
    %3 = vector.load %arg4[%c0_3, %c0_4] : memref<1x64xf32, #tpu.memory_space<vmem>>, vector<1x64xf32>
    %4 = vector.broadcast %3 : vector<1x64xf32> to vector<16x64xf32>
    %5 = arith.addf %2, %4 : vector<16x64xf32>
    %cst_5 = arith.constant 0.000000e+00 : f32
    %6 = vector.broadcast %cst_5 : f32 to vector<16x64xf32>
    %7 = arith.cmpf ogt, %5, %6 : vector<16x64xf32>
    %cst_6 = arith.constant 2.000000e-01 : f32
    %8 = vector.broadcast %cst_6 : f32 to vector<16x64xf32>
    %9 = arith.mulf %8, %5 : vector<16x64xf32>
    %10 = arith.select %7, %5, %9 : vector<16x64xi1>, vector<16x64xf32>
    %11 = arith.truncf %10 : vector<16x64xf32> to vector<16x64xbf16>
    %c0_7 = arith.constant 0 : index
    %c0_8 = arith.constant 0 : index
    %12 = vector.load %arg5[%c0_7, %c0_8] : memref<64x64xbf16, #tpu.memory_space<vmem>>, vector<64x64xbf16>
    %cst_9 = arith.constant dense<0.000000e+00> : vector<16x64xf32>
    %13 = tpu.matmul %11, %12, %cst_9 {dimension_numbers = #tpu.dot_dimension_numbers<[1], [0], [0], [1], [0, 0, 1, 1], [], []>} : vector<16x64xbf16>, vector<64x64xbf16>, vector<16x64xf32> -> vector<16x64xf32>
    %c0_10 = arith.constant 0 : index
    %c0_11 = arith.constant 0 : index
    %14 = vector.load %arg6[%c0_10, %c0_11] : memref<1x64xf32, #tpu.memory_space<vmem>>, vector<1x64xf32>
    %15 = vector.broadcast %14 : vector<1x64xf32> to vector<16x64xf32>
    %16 = arith.addf %13, %15 : vector<16x64xf32>
    %cst_12 = arith.constant 0.000000e+00 : f32
    %17 = vector.broadcast %cst_12 : f32 to vector<16x64xf32>
    %18 = arith.cmpf ogt, %16, %17 : vector<16x64xf32>
    %cst_13 = arith.constant 2.000000e-01 : f32
    %19 = vector.broadcast %cst_13 : f32 to vector<16x64xf32>
    %20 = arith.mulf %19, %16 : vector<16x64xf32>
    %21 = arith.select %18, %16, %20 : vector<16x64xi1>, vector<16x64xf32>
    %22 = arith.truncf %21 : vector<16x64xf32> to vector<16x64xbf16>
    %c0_14 = arith.constant 0 : index
    %c0_15 = arith.constant 0 : index
    %23 = vector.load %arg7[%c0_14, %c0_15] : memref<64x256xbf16, #tpu.memory_space<vmem>>, vector<64x256xbf16>
    %cst_16 = arith.constant dense<0.000000e+00> : vector<16x256xf32>
    %24 = tpu.matmul %22, %23, %cst_16 {dimension_numbers = #tpu.dot_dimension_numbers<[1], [0], [0], [1], [0, 0, 1, 1], [], []>} : vector<16x64xbf16>, vector<64x256xbf16>, vector<16x256xf32> -> vector<16x256xf32>
    %c0_17 = arith.constant 0 : index
    %c0_18 = arith.constant 0 : index
    %25 = vector.load %arg2[%c0_17, %c0_18] : memref<16x16xbf16, #tpu.memory_space<vmem>>, vector<16x16xbf16>
    %c0_19 = arith.constant 0 : index
    %c0_20 = arith.constant 0 : index
    %26 = vector.load %arg8[%c0_19, %c0_20] : memref<16x256xbf16, #tpu.memory_space<vmem>>, vector<16x256xbf16>
    %cst_21 = arith.constant dense<0.000000e+00> : vector<16x256xf32>
    %27 = tpu.matmul %25, %26, %cst_21 {dimension_numbers = #tpu.dot_dimension_numbers<[1], [0], [0], [1], [0, 0, 1, 1], [], []>} : vector<16x16xbf16>, vector<16x256xbf16>, vector<16x256xf32> -> vector<16x256xf32>
    %28 = arith.addf %24, %27 : vector<16x256xf32>
    %c0_22 = arith.constant 0 : index
    %c0_23 = arith.constant 0 : index
    %29 = vector.load %arg9[%c0_22, %c0_23] : memref<1x256xf32, #tpu.memory_space<vmem>>, vector<1x256xf32>
    %30 = vector.broadcast %29 : vector<1x256xf32> to vector<16x256xf32>
    %31 = arith.addf %28, %30 : vector<16x256xf32>
    %cst_24 = arith.constant 0.000000e+00 : f32
    %32 = vector.broadcast %cst_24 : f32 to vector<16x256xf32>
    %33 = arith.cmpf ogt, %31, %32 : vector<16x256xf32>
    %cst_25 = arith.constant 2.000000e-01 : f32
    %34 = vector.broadcast %cst_25 : f32 to vector<16x256xf32>
    %35 = arith.mulf %34, %31 : vector<16x256xf32>
    %36 = arith.select %33, %31, %35 : vector<16x256xi1>, vector<16x256xf32>
    %37 = arith.truncf %36 : vector<16x256xf32> to vector<16x256xbf16>
    %c0_26 = arith.constant 0 : index
    %c0_27 = arith.constant 0 : index
    %38 = vector.load %arg18[%c0_26, %c0_27] : memref<32x256xbf16, #tpu.memory_space<vmem>>, vector<16x256xbf16>
    tpu.vector_store %arg18[%c0_26, %c0_27], %37 {strides = array<i32>} : memref<32x256xbf16, #tpu.memory_space<vmem>>, vector<16x256xbf16>,
    %cst_28 = arith.constant 1.000000e+00 : f32
    %cst_29 = arith.constant 2.000000e-01 : f32
    %39 = vector.broadcast %cst_28 : f32 to vector<16x256xf32>
    %40 = vector.broadcast %cst_29 : f32 to vector<16x256xf32>
    %41 = arith.select %33, %39, %40 : vector<16x256xi1>, vector<16x256xf32>
    %c0_30 = arith.constant 0 : index
    %c0_31 = arith.constant 0 : index
    %42 = vector.load %arg10[%c0_30, %c0_31] : memref<1x256xf32, #tpu.memory_space<vmem>>, vector<1x256xf32>
    %43 = vector.broadcast %42 : vector<1x256xf32> to vector<16x256xf32>
    %44 = arith.mulf %41, %43 : vector<16x256xf32>
    %45 = arith.truncf %44 : vector<16x256xf32> to vector<16x256xbf16>
    %c16 = arith.constant 16 : index
    %c0_32 = arith.constant 0 : index
    %46 = vector.load %arg18[%c16, %c0_32] : memref<32x256xbf16, #tpu.memory_space<vmem>>, vector<16x256xbf16>
    tpu.vector_store %arg18[%c16, %c0_32], %45 {strides = array<i32>} : memref<32x256xbf16, #tpu.memory_space<vmem>>, vector<16x256xbf16>,
    %c0_33 = arith.constant 0 : index
    %c0_34 = arith.constant 0 : index
    %47 = vector.load %arg18[%c0_33, %c0_34] : memref<32x256xbf16, #tpu.memory_space<vmem>>, vector<32x256xbf16>
    %c0_35 = arith.constant 0 : index
    %c0_36 = arith.constant 0 : index
    %48 = vector.load %arg11[%c0_35, %c0_36] : memref<256x256xbf16, #tpu.memory_space<vmem>>, vector<256x256xbf16>
    %cst_37 = arith.constant dense<0.000000e+00> : vector<32x256xf32>
    %49 = tpu.matmul %47, %48, %cst_37 {dimension_numbers = #tpu.dot_dimension_numbers<[1], [0], [0], [1], [0, 0, 1, 1], [], []>} : vector<32x256xbf16>, vector<256x256xbf16>, vector<32x256xf32> -> vector<32x256xf32>
    %50 = vector.extract_strided_slice %49 {offsets = [0, 0], sizes = [16, 256], strides = [1, 1]} : vector<32x256xf32> to vector<16x256xf32>
    %c0_38 = arith.constant 0 : index
    %c0_39 = arith.constant 0 : index
    %51 = vector.load %arg12[%c0_38, %c0_39] : memref<1x256xf32, #tpu.memory_space<vmem>>, vector<1x256xf32>
    %52 = vector.broadcast %51 : vector<1x256xf32> to vector<16x256xf32>
    %53 = arith.addf %50, %52 : vector<16x256xf32>
    %cst_40 = arith.constant 0.000000e+00 : f32
    %54 = vector.broadcast %cst_40 : f32 to vector<16x256xf32>
    %55 = arith.cmpf ogt, %53, %54 : vector<16x256xf32>
    %cst_41 = arith.constant 2.000000e-01 : f32
    %56 = vector.broadcast %cst_41 : f32 to vector<16x256xf32>
    %57 = arith.mulf %56, %53 : vector<16x256xf32>
    %58 = arith.select %55, %53, %57 : vector<16x256xi1>, vector<16x256xf32>
    %59 = arith.truncf %58 : vector<16x256xf32> to vector<16x256xbf16>
    %c0_42 = arith.constant 0 : index
    %c0_43 = arith.constant 0 : index
    %60 = vector.load %arg18[%c0_42, %c0_43] : memref<32x256xbf16, #tpu.memory_space<vmem>>, vector<16x256xbf16>
    tpu.vector_store %arg18[%c0_42, %c0_43], %59 {strides = array<i32>} : memref<32x256xbf16, #tpu.memory_space<vmem>>, vector<16x256xbf16>,
    %cst_44 = arith.constant 1.000000e+00 : f32
    %cst_45 = arith.constant 2.000000e-01 : f32
    %61 = vector.broadcast %cst_44 : f32 to vector<16x256xf32>
    %62 = vector.broadcast %cst_45 : f32 to vector<16x256xf32>
    %63 = arith.select %55, %61, %62 : vector<16x256xi1>, vector<16x256xf32>
    %64 = vector.extract_strided_slice %49 {offsets = [16, 0], sizes = [16, 256], strides = [1, 1]} : vector<32x256xf32> to vector<16x256xf32>
    %65 = arith.mulf %63, %64 : vector<16x256xf32>
    %66 = arith.truncf %65 : vector<16x256xf32> to vector<16x256xbf16>
    %c16_46 = arith.constant 16 : index
    %c0_47 = arith.constant 0 : index
    %67 = vector.load %arg18[%c16_46, %c0_47] : memref<32x256xbf16, #tpu.memory_space<vmem>>, vector<16x256xbf16>
    tpu.vector_store %arg18[%c16_46, %c0_47], %66 {strides = array<i32>} : memref<32x256xbf16, #tpu.memory_space<vmem>>, vector<16x256xbf16>,
    %c0_48 = arith.constant 0 : index
    %c0_49 = arith.constant 0 : index
    %68 = vector.load %arg18[%c0_48, %c0_49] : memref<32x256xbf16, #tpu.memory_space<vmem>>, vector<32x256xbf16>
    %c0_50 = arith.constant 0 : index
    %c0_51 = arith.constant 0 : index
    %69 = vector.load %arg13[%c0_50, %c0_51] : memref<256x256xbf16, #tpu.memory_space<vmem>>, vector<256x256xbf16>
    %cst_52 = arith.constant dense<0.000000e+00> : vector<32x256xf32>
    %70 = tpu.matmul %68, %69, %cst_52 {dimension_numbers = #tpu.dot_dimension_numbers<[1], [0], [0], [1], [0, 0, 1, 1], [], []>} : vector<32x256xbf16>, vector<256x256xbf16>, vector<32x256xf32> -> vector<32x256xf32>
    %71 = vector.extract_strided_slice %70 {offsets = [0, 0], sizes = [16, 256], strides = [1, 1]} : vector<32x256xf32> to vector<16x256xf32>
    %c0_53 = arith.constant 0 : index
    %c0_54 = arith.constant 0 : index
    %72 = vector.load %arg14[%c0_53, %c0_54] : memref<1x256xf32, #tpu.memory_space<vmem>>, vector<1x256xf32>
    %73 = vector.broadcast %72 : vector<1x256xf32> to vector<16x256xf32>
    %74 = arith.addf %71, %73 : vector<16x256xf32>
    %cst_55 = arith.constant 0.000000e+00 : f32
    %75 = vector.broadcast %cst_55 : f32 to vector<16x256xf32>
    %76 = arith.cmpf ogt, %74, %75 : vector<16x256xf32>
    %cst_56 = arith.constant 2.000000e-01 : f32
    %77 = vector.broadcast %cst_56 : f32 to vector<16x256xf32>
    %78 = arith.mulf %77, %74 : vector<16x256xf32>
    %79 = arith.select %76, %74, %78 : vector<16x256xi1>, vector<16x256xf32>
    %80 = arith.truncf %79 : vector<16x256xf32> to vector<16x256xbf16>
    %c0_57 = arith.constant 0 : index
    %c0_58 = arith.constant 0 : index
    %81 = vector.load %arg18[%c0_57, %c0_58] : memref<32x256xbf16, #tpu.memory_space<vmem>>, vector<16x256xbf16>
    tpu.vector_store %arg18[%c0_57, %c0_58], %80 {strides = array<i32>} : memref<32x256xbf16, #tpu.memory_space<vmem>>, vector<16x256xbf16>,
    %cst_59 = arith.constant 1.000000e+00 : f32
    %cst_60 = arith.constant 2.000000e-01 : f32
    %82 = vector.broadcast %cst_59 : f32 to vector<16x256xf32>
    %83 = vector.broadcast %cst_60 : f32 to vector<16x256xf32>
    %84 = arith.select %76, %82, %83 : vector<16x256xi1>, vector<16x256xf32>
    %85 = vector.extract_strided_slice %70 {offsets = [16, 0], sizes = [16, 256], strides = [1, 1]} : vector<32x256xf32> to vector<16x256xf32>
    %86 = arith.mulf %84, %85 : vector<16x256xf32>
    %87 = arith.truncf %86 : vector<16x256xf32> to vector<16x256xbf16>
    %c16_61 = arith.constant 16 : index
    %c0_62 = arith.constant 0 : index
    %88 = vector.load %arg18[%c16_61, %c0_62] : memref<32x256xbf16, #tpu.memory_space<vmem>>, vector<16x256xbf16>
    tpu.vector_store %arg18[%c16_61, %c0_62], %87 {strides = array<i32>} : memref<32x256xbf16, #tpu.memory_space<vmem>>, vector<16x256xbf16>,
    %c0_63 = arith.constant 0 : index
    %c0_64 = arith.constant 0 : index
    %89 = vector.load %arg18[%c0_63, %c0_64] : memref<32x256xbf16, #tpu.memory_space<vmem>>, vector<32x256xbf16>
    %c0_65 = arith.constant 0 : index
    %c0_66 = arith.constant 0 : index
    %90 = vector.load %arg15[%c0_65, %c0_66] : memref<256x128xbf16, #tpu.memory_space<vmem>>, vector<256x128xbf16>
    %cst_67 = arith.constant dense<0.000000e+00> : vector<32x128xf32>
    %91 = tpu.matmul %89, %90, %cst_67 {dimension_numbers = #tpu.dot_dimension_numbers<[1], [0], [0], [1], [0, 0, 1, 1], [], []>} : vector<32x256xbf16>, vector<256x128xbf16>, vector<32x128xf32> -> vector<32x128xf32>
    %92 = vector.extract_strided_slice %91 {offsets = [0, 0], sizes = [16, 128], strides = [1, 1]} : vector<32x128xf32> to vector<16x128xf32>
    %c0_68 = arith.constant 0 : index
    %c0_69 = arith.constant 0 : index
    %93 = vector.load %arg16[%c0_68, %c0_69] : memref<1x128xf32, #tpu.memory_space<vmem>>, vector<1x128xf32>
    %94 = vector.broadcast %93 : vector<1x128xf32> to vector<16x128xf32>
    %95 = arith.addf %92, %94 : vector<16x128xf32>
    %96 = vector.extract_strided_slice %91 {offsets = [16, 0], sizes = [16, 128], strides = [1, 1]} : vector<32x128xf32> to vector<16x128xf32>
    %97 = tpu.iota {dimensions = array<i32: 1>} : vector<16x128xi32>
    %c4_i32 = arith.constant 4 : i32
    %98 = vector.broadcast %c4_i32 : i32 to vector<16x128xi32>
    %99 = arith.cmpi slt, %97, %98 : vector<16x128xi32>
    %100 = math.absf %96 : vector<16x128xf32>
    %cst_70 = arith.constant 1.000000e-30 : f32
    %101 = vector.broadcast %cst_70 : f32 to vector<16x128xf32>
    %102 = arith.maximumf %100, %101 : vector<16x128xf32>
    %103 = math.log %102 : vector<16x128xf32>
    %cst_71 = arith.constant 0.000000e+00 : f32
    %104 = vector.broadcast %cst_71 : f32 to vector<16x128xf32>
    %105 = arith.select %99, %103, %104 : vector<16x128xi1>, vector<16x128xf32>
    %cst_72 = arith.constant dense<0.000000e+00> : vector<16xf32>
    %106 = vector.multi_reduction <add>, %105, %cst_72 [1] : vector<16x128xf32> to vector<16xf32>
    %107 = vector.shape_cast %106 : vector<16xf32> to vector<16x1xf32>
    %cst_73 = arith.constant 0.000000e+00 : f32
    %108 = vector.broadcast %cst_73 : f32 to vector<16x128xf32>
    %109 = arith.select %99, %95, %108 : vector<16x128xi1>, vector<16x128xf32>
    %c4_i32_74 = arith.constant 4 : i32
    %110 = vector.broadcast %c4_i32_74 : i32 to vector<16x128xi32>
    %111 = arith.cmpi eq, %97, %110 : vector<16x128xi32>
    %112 = vector.shape_cast %107 : vector<16x1xf32> to vector<16x1xf32>
    %113 = vector.broadcast %112 : vector<16x1xf32> to vector<16x128xf32>
    %114 = arith.select %111, %113, %109 : vector<16x128xi1>, vector<16x128xf32>
    %115 = tpu.iota {dimensions = array<i32: 0>} : vector<16x128xi32>
    %c16_i32 = arith.constant 16 : i32
    %116 = arith.muli %arg0, %c16_i32 : i32
    %117 = vector.broadcast %116 : i32 to vector<16x128xi32>
    %118 = arith.addi %115, %117 : vector<16x128xi32>
    %c16_i32_75 = arith.constant 16 : i32
    %119 = vector.broadcast %c16_i32_75 : i32 to vector<16x128xi32>
    %120 = arith.cmpi slt, %118, %119 : vector<16x128xi32>
    %cst_76 = arith.constant 0.000000e+00 : f32
    %121 = vector.broadcast %cst_76 : f32 to vector<16x128xf32>
    %122 = arith.select %120, %114, %121 : vector<16x128xi1>, vector<16x128xf32>
    %123 = arith.truncf %122 : vector<16x128xf32> to vector<16x128xbf16>
    %c0_77 = arith.constant 0 : index
    %c0_78 = arith.constant 0 : index
    %124 = vector.load %arg17[%c0_77, %c0_78] : memref<16x128xbf16, #tpu.memory_space<vmem>>, vector<16x128xbf16>
    tpu.vector_store %arg17[%c0_77, %c0_78], %123 {strides = array<i32>} : memref<16x128xbf16, #tpu.memory_space<vmem>>, vector<16x128xbf16>,
    return
  }
  func.func @transform_0(%arg0: i32) -> (i32, i32) {
    %c0_i32 = arith.constant 0 : i32
    %c0_i32_0 = arith.constant 0 : i32
    return %arg0, %c0_i32 : i32, i32
  }
  func.func @transform_1(%arg0: i32) -> (i32, i32) {
    %c0_i32 = arith.constant 0 : i32
    %c0_i32_0 = arith.constant 0 : i32
    return %arg0, %c0_i32 : i32, i32
  }
  func.func @transform_2(%arg0: i32) -> (i32, i32) {
    %c0_i32 = arith.constant 0 : i32
    %c0_i32_0 = arith.constant 0 : i32
    %c0_i32_1 = arith.constant 0 : i32
    return %c0_i32, %c0_i32_0 : i32, i32
  }
  func.func @transform_3(%arg0: i32) -> (i32, i32) {
    %c0_i32 = arith.constant 0 : i32
    %c0_i32_0 = arith.constant 0 : i32
    %c0_i32_1 = arith.constant 0 : i32
    return %c0_i32, %c0_i32_0 : i32, i32
  }
  func.func @transform_4(%arg0: i32) -> (i32, i32) {
    %c0_i32 = arith.constant 0 : i32
    %c0_i32_0 = arith.constant 0 : i32
    %c0_i32_1 = arith.constant 0 : i32
    return %c0_i32, %c0_i32_0 : i32, i32
  }
  func.func @transform_5(%arg0: i32) -> (i32, i32) {
    %c0_i32 = arith.constant 0 : i32
    %c0_i32_0 = arith.constant 0 : i32
    %c0_i32_1 = arith.constant 0 : i32
    return %c0_i32, %c0_i32_0 : i32, i32
  }
  func.func @transform_6(%arg0: i32) -> (i32, i32) {
    %c0_i32 = arith.constant 0 : i32
    %c0_i32_0 = arith.constant 0 : i32
    %c0_i32_1 = arith.constant 0 : i32
    return %c0_i32, %c0_i32_0 : i32, i32
  }
  func.func @transform_7(%arg0: i32) -> (i32, i32) {
    %c0_i32 = arith.constant 0 : i32
    %c0_i32_0 = arith.constant 0 : i32
    %c0_i32_1 = arith.constant 0 : i32
    return %c0_i32, %c0_i32_0 : i32, i32
  }
  func.func @transform_8(%arg0: i32) -> (i32, i32) {
    %c0_i32 = arith.constant 0 : i32
    %c0_i32_0 = arith.constant 0 : i32
    %c0_i32_1 = arith.constant 0 : i32
    return %c0_i32, %c0_i32_0 : i32, i32
  }
  func.func @transform_9(%arg0: i32) -> (i32, i32) {
    %c0_i32 = arith.constant 0 : i32
    %c0_i32_0 = arith.constant 0 : i32
    %c0_i32_1 = arith.constant 0 : i32
    return %c0_i32, %c0_i32_0 : i32, i32
  }
  func.func @transform_10(%arg0: i32) -> (i32, i32) {
    %c0_i32 = arith.constant 0 : i32
    %c0_i32_0 = arith.constant 0 : i32
    %c0_i32_1 = arith.constant 0 : i32
    return %c0_i32, %c0_i32_0 : i32, i32
  }
  func.func @transform_11(%arg0: i32) -> (i32, i32) {
    %c0_i32 = arith.constant 0 : i32
    %c0_i32_0 = arith.constant 0 : i32
    %c0_i32_1 = arith.constant 0 : i32
    return %c0_i32, %c0_i32_0 : i32, i32
  }
  func.func @transform_12(%arg0: i32) -> (i32, i32) {
    %c0_i32 = arith.constant 0 : i32
    %c0_i32_0 = arith.constant 0 : i32
    %c0_i32_1 = arith.constant 0 : i32
    return %c0_i32, %c0_i32_0 : i32, i32
  }
  func.func @transform_13(%arg0: i32) -> (i32, i32) {
    %c0_i32 = arith.constant 0 : i32
    %c0_i32_0 = arith.constant 0 : i32
    %c0_i32_1 = arith.constant 0 : i32
    return %c0_i32, %c0_i32_0 : i32, i32
  }
  func.func @transform_14(%arg0: i32) -> (i32, i32) {
    %c0_i32 = arith.constant 0 : i32
    %c0_i32_0 = arith.constant 0 : i32
    %c0_i32_1 = arith.constant 0 : i32
    return %c0_i32, %c0_i32_0 : i32, i32
  }
  func.func @transform_15(%arg0: i32) -> (i32, i32) {
    %c0_i32 = arith.constant 0 : i32
    %c0_i32_0 = arith.constant 0 : i32
    %c0_i32_1 = arith.constant 0 : i32
    return %c0_i32, %c0_i32_0 : i32, i32
  }
  func.func @transform_16(%arg0: i32) -> (i32, i32) {
    %c0_i32 = arith.constant 0 : i32
    %c0_i32_0 = arith.constant 0 : i32
    return %arg0, %c0_i32 : i32, i32
  }
}

</mosaic_0001>

<llo_original>
// kernel: squeeze.3
$region0: #{squeeze.3}
  %s0 = inlined_call_operand.vmem [shape: f32[16], index: 0, kind: input, shape index: {}]
  %s1 = inlined_call_operand.vmem [shape: f32[2,8], index: 1, kind: output, shape index: {}]
  $region1: #{squeeze.3} parent=0
    #allocation0 [shape = 'u8[4096]{0}', space=vmem, size = 0x1000, scoped, tag = 'scoped mem for output reshape']
    #allocation1 [shape = 'u8[4096]{0}', space=vmem, size = 0x1000, scoped, tag = 'scoped mem for input reshape']
    %s3 = ssub.s32 2, 1
    %v4 = vld [vmem:[%s0] sm:%s3]
    %5 = vst [vmem:[#allocation1] sm:%s3] %v4
    %v6 = vld [vmem:[#allocation1] sm:$0x1]
    %vm7 = vcmask 64512
    %8 = vst.msk [vmem:[#allocation0] sm:$0x1] %vm7, %v6
    %v9 = vld [vmem:[#allocation1] sm:$0x1]
    %10 = vrot.lane.b32.xlu0 %v9, 120
    %v11 = vpop.permute.xlu0 %10
    %vm12 = vcmask 64512
    %s13 = scalar_lea.vmem [#allocation0], 1
    %14 = vst.msk [vmem:[%s13] sm:$0x1] %vm12, %v11
    %s16 = ssub.s32 4, 1
    %v17 = vld [vmem:[#allocation0] sm:%s16]
    %s19 = ssub.s32 4, 1
    %20 = vst [vmem:[%s1] sm:%s19] %v17

// kernel: np_change_transition_prior.1
$region0: #{np_change_transition_prior.1}
  #allocation0 [shape = 'u32[]', space=smem, size = 0x4, offset = 0x4, fixed_abs, tag = 'smem constant byte address 0x4 - core index']
  #allocation1 [shape = 'u32[72,128]{1,0:T(1,128)}', space=vmem, size = 0x9000, scoped, tag = 'internal scratch']
  #allocation2 [shape = 'bf16[32,256]{1,0:T(8,128)(2,1)}', space=vmem, size = 0x4000, scoped, tag = 'scratch operand']
  %s0 = inlined_call_operand.vmem [shape: bf16[16,8], index: 0, kind: input, shape index: {}]
  %s1 = inlined_call_operand.vmem [shape: bf16[16,16], index: 1, kind: input, shape index: {}]
  %s2 = inlined_call_operand.vmem [shape: bf16[8,64], index: 2, kind: input, shape index: {}]
  %s3 = inlined_call_operand.vmem [shape: f32[1,64], index: 3, kind: input, shape index: {}]
  %s4 = inlined_call_operand.hbm [shape: bf16[64,64], index: 4, kind: input, shape index: {}]
  %s5 = inlined_call_operand.vmem [shape: f32[1,64], index: 5, kind: input, shape index: {}]
  %s6 = inlined_call_operand.hbm [shape: bf16[64,256], index: 6, kind: input, shape index: {}]
  %s7 = inlined_call_operand.hbm [shape: bf16[16,256], index: 7, kind: input, shape index: {}]
  %s8 = inlined_call_operand.vmem [shape: f32[1,256], index: 8, kind: input, shape index: {}]
  %s9 = inlined_call_operand.vmem [shape: f32[1,256], index: 9, kind: input, shape index: {}]
  %s10 = inlined_call_operand.hbm [shape: bf16[256,256], index: 10, kind: input, shape index: {}]
  %s11 = inlined_call_operand.vmem [shape: f32[1,256], index: 11, kind: input, shape index: {}]
  %s12 = inlined_call_operand.hbm [shape: bf16[256,256], index: 12, kind: input, shape index: {}]
  %s13 = inlined_call_operand.vmem [shape: f32[1,256], index: 13, kind: input, shape index: {}]
  %s14 = inlined_call_operand.vmem [shape: bf16[256,128], index: 14, kind: input, shape index: {}]
  %s15 = inlined_call_operand.vmem [shape: f32[1,128], index: 15, kind: input, shape index: {}]
  %s16 = inlined_call_operand.vmem [shape: bf16[16,128], index: 16, kind: output, shape index: {}]
  %s17 = sld [smem:[#allocation0]]
  $region94: #{np_change_transition_prior.1} parent=0
    _
  %s19 = ssub.s32 1, %s17
  %s20 = scalar_select 0, %s19, %s17
  $region1: #{np_change_transition_prior.1} parent=0
    #allocation3 [shape = 'u8[16384]{0}', space=vmem, size = 0x4000, scoped, tag = 'input window, operand 4, single buffered']
    #allocation4 [shape = 's32[1]{0}', space=sflag, size = 0x4, scoped, tag = 'scoped memory for np_change_transition_prior.1']
    #allocation5 [shape = 'u8[32768]{0}', space=vmem, size = 0x8000, scoped, tag = 'input window, operand 6, single buffered']
    #allocation6 [shape = 's32[1]{0}', space=sflag, size = 0x4, scoped, tag = 'scoped memory for np_change_transition_prior.1']
    #allocation7 [shape = 'u8[8192]{0}', space=vmem, size = 0x2000, scoped, tag = 'input window, operand 7, single buffered']
    #allocation8 [shape = 'u8[131072]{0}', space=vmem, size = 0x20000, scoped, tag = 'input window, operand 10, single buffered']
    #allocation9 [shape = 's32[1]{0}', space=sflag, size = 0x4, scoped, tag = 'scoped memory for np_change_transition_prior.1']
    #allocation10 [shape = 'u8[131072]{0}', space=vmem, size = 0x20000, scoped, tag = 'input window, operand 12, single buffered']
    %21 = vsyncpa [#allocation4], 0
    %22 = vsyncpa [#allocation6], 0
    %23 = vsyncpa [#allocation9], 0
    // Predicated region
    $region2: #{np_change_transition_prior.1} parent=1 // pred_check
      _
    $region3: #{np_change_transition_prior.1} parent=1 // pred_check_branch
      %25 = sbr.rel (0) target = $region5
    $region4: #{np_change_transition_prior.1} parent=1 // pred_region
      _
    $region5: #{np_change_transition_prior.1} parent=1 // pred_fallthru
      _
    // Predicated region
    $region6: #{np_change_transition_prior.1} parent=1 // pred_check
      _
    $region7: #{np_change_transition_prior.1} parent=1 // pred_check_branch
      %27 = sbr.rel (0) target = $region9
    $region8: #{np_change_transition_prior.1} parent=1 // pred_region
      _
    $region9: #{np_change_transition_prior.1} parent=1 // pred_fallthru
      _
    // Predicated region
    $region10: #{np_change_transition_prior.1} parent=1 // pred_check
      _
    $region11: #{np_change_transition_prior.1} parent=1 // pred_check_branch
      %29 = sbr.rel (0) target = $region13
    $region12: #{np_change_transition_prior.1} parent=1 // pred_region
      _
    $region13: #{np_change_transition_prior.1} parent=1 // pred_fallthru
      _
    // Predicated region
    $region14: #{np_change_transition_prior.1} parent=1 // pred_check
      _
    $region15: #{np_change_transition_prior.1} parent=1 // pred_check_branch
      %31 = sbr.rel (0) target = $region17
    $region16: #{np_change_transition_prior.1} parent=1 // pred_region
      _
    $region17: #{np_change_transition_prior.1} parent=1 // pred_fallthru
      _
    // Predicated region
    $region18: #{np_change_transition_prior.1} parent=1 // pred_check
      _
    $region19: #{np_change_transition_prior.1} parent=1 // pred_check_branch
      %33 = sbr.rel (0) target = $region21
    $region20: #{np_change_transition_prior.1} parent=1 // pred_region
      %35 = vsyncadd [#allocation4], 0
      %s36 = sshll.u32 %s4, 4
      %s37 = int_to_ptr.hbm [resolvable:$true] %s36
      %s38 = sshll.u32 [#allocation3], 4
      %s39 = int_to_ptr.vmem [resolvable:$true] %s38
      %44 = dma.hbm_to_vmem [thread:$0]  %s37, 512, %s39, [#allocation4], 64, 64, 4
    $region21: #{np_change_transition_prior.1} parent=1 // pred_fallthru
      _
    // Predicated region
    $region22: #{np_change_transition_prior.1} parent=1 // pred_check
      _
    $region23: #{np_change_transition_prior.1} parent=1 // pred_check_branch
      %46 = sbr.rel (0) target = $region25
    $region24: #{np_change_transition_prior.1} parent=1 // pred_region
      _
    $region25: #{np_change_transition_prior.1} parent=1 // pred_fallthru
      _
    // Predicated region
    $region26: #{np_change_transition_prior.1} parent=1 // pred_check
      _
    $region27: #{np_change_transition_prior.1} parent=1 // pred_check_branch
      %48 = sbr.rel (0) target = $region29
    $region28: #{np_change_transition_prior.1} parent=1 // pred_region
      %50 = vsyncadd [#allocation6], 0
      %s51 = sshll.u32 %s6, 4
      %s52 = int_to_ptr.hbm [resolvable:$true] %s51
      %s53 = sshll.u32 [#allocation5], 4
      %s54 = int_to_ptr.vmem [resolvable:$true] %s53
      %59 = dma.hbm_to_vmem [thread:$0]  %s52, 1024, %s54, [#allocation6], 128, 128, 8
    $region29: #{np_change_transition_prior.1} parent=1 // pred_fallthru
      _
    // Predicated region
    $region30: #{np_change_transition_prior.1} parent=1 // pred_check
      _
    $region31: #{np_change_transition_prior.1} parent=1 // pred_check_branch
      %61 = sbr.rel (0) target = $region33
    $region32: #{np_change_transition_prior.1} parent=1 // pred_region
      %63 = vsyncadd [#allocation6], 0
      %s64 = sshll.u32 %s7, 4
      %s65 = int_to_ptr.hbm [resolvable:$true] %s64
      %s66 = sshll.u32 [#allocation7], 4
      %s67 = int_to_ptr.vmem [resolvable:$true] %s66
      %72 = dma.hbm_to_vmem [thread:$0]  %s65, 256, %s67, [#allocation6], 128, 128, 8
    $region33: #{np_change_transition_prior.1} parent=1 // pred_fallthru
      _
    // Predicated region
    $region34: #{np_change_transition_prior.1} parent=1 // pred_check
      _
    $region35: #{np_change_transition_prior.1} parent=1 // pred_check_branch
      %74 = sbr.rel (0) target = $region37
    $region36: #{np_change_transition_prior.1} parent=1 // pred_region
      _
    $region37: #{np_change_transition_prior.1} parent=1 // pred_fallthru
      _
    // Predicated region
    $region38: #{np_change_transition_prior.1} parent=1 // pred_check
      _
    $region39: #{np_change_transition_prior.1} parent=1 // pred_check_branch
      %76 = sbr.rel (0) target = $region41
    $region40: #{np_change_transition_prior.1} parent=1 // pred_region
      _
    $region41: #{np_change_transition_prior.1} parent=1 // pred_fallthru
      _
    // Predicated region
    $region42: #{np_change_transition_prior.1} parent=1 // pred_check
      _
    $region43: #{np_change_transition_prior.1} parent=1 // pred_check_branch
      %78 = sbr.rel (0) target = $region45
    $region44: #{np_change_transition_prior.1} parent=1 // pred_region
      %80 = vsyncadd [#allocation9], 0
      %s81 = sshll.u32 %s10, 4
      %s82 = int_to_ptr.hbm [resolvable:$true] %s81
      %s83 = sshll.u32 [#allocation8], 4
      %s84 = int_to_ptr.vmem [resolvable:$true] %s83
      %89 = dma.hbm_to_vmem [thread:$0]  %s82, 4096, %s84, [#allocation9], 128, 128, 8
    $region45: #{np_change_transition_prior.1} parent=1 // pred_fallthru
      _
    // Predicated region
    $region46: #{np_change_transition_prior.1} parent=1 // pred_check
      _
    $region47: #{np_change_transition_prior.1} parent=1 // pred_check_branch
      %91 = sbr.rel (0) target = $region49
    $region48: #{np_change_transition_prior.1} parent=1 // pred_region
      _
    $region49: #{np_change_transition_prior.1} parent=1 // pred_fallthru
      _
    // Predicated region
    $region50: #{np_change_transition_prior.1} parent=1 // pred_check
      _
    $region51: #{np_change_transition_prior.1} parent=1 // pred_check_branch
      %93 = sbr.rel (0) target = $region53
    $region52: #{np_change_transition_prior.1} parent=1 // pred_region
      %95 = vsyncadd [#allocation9], 0
      %s96 = sshll.u32 %s12, 4
      %s97 = int_to_ptr.hbm [resolvable:$true] %s96
      %s98 = sshll.u32 [#allocation10], 4
      %s99 = int_to_ptr.vmem [resolvable:$true] %s98
      %104 = dma.hbm_to_vmem [thread:$0]  %s97, 4096, %s99, [#allocation9], 128, 128, 8
    $region53: #{np_change_transition_prior.1} parent=1 // pred_fallthru
      _
    // Predicated region
    $region54: #{np_change_transition_prior.1} parent=1 // pred_check
      _
    $region55: #{np_change_transition_prior.1} parent=1 // pred_check_branch
      %106 = sbr.rel (0) target = $region57
    $region56: #{np_change_transition_prior.1} parent=1 // pred_region
      _
    $region57: #{np_change_transition_prior.1} parent=1 // pred_fallthru
      _
    // Predicated region
    $region58: #{np_change_transition_prior.1} parent=1 // pred_check
      _
    $region59: #{np_change_transition_prior.1} parent=1 // pred_check_branch
      %108 = sbr.rel (0) target = $region61
    $region60: #{np_change_transition_prior.1} parent=1 // pred_region
      _
    $region61: #{np_change_transition_prior.1} parent=1 // pred_fallthru
      _
    // Predicated region
    $region62: #{np_change_transition_prior.1} parent=1 // pred_check
      _
    $region63: #{np_change_transition_prior.1} parent=1 // pred_check_branch
      %110 = sbr.rel (0) target = $region65
    $region64: #{np_change_transition_prior.1} parent=1 // pred_region
      _
    $region65: #{np_change_transition_prior.1} parent=1 // pred_fallthru
      _
    // Predicated region
    $region66: #{np_change_transition_prior.1} parent=1 // pred_check
      _
    $region67: #{np_change_transition_prior.1} parent=1 // pred_check_branch
      %112 = sbr.rel (0) target = $region69
    $region68: #{np_change_transition_prior.1} parent=1 // pred_region
      %114 = dma.done [#allocation4], 512
    $region69: #{np_change_transition_prior.1} parent=1 // pred_fallthru
      _
    // Predicated region
    $region70: #{np_change_transition_prior.1} parent=1 // pred_check
      _
    $region71: #{np_change_transition_prior.1} parent=1 // pred_check_branch
      %116 = sbr.rel (0) target = $region73
    $region72: #{np_change_transition_prior.1} parent=1 // pred_region
      %118 = dma.done [#allocation6], 1024
    $region73: #{np_change_transition_prior.1} parent=1 // pred_fallthru
      _
    // Predicated region
    $region74: #{np_change_transition_prior.1} parent=1 // pred_check
      _
    $region75: #{np_change_transition_prior.1} parent=1 // pred_check_branch
      %120 = sbr.rel (0) target = $region77
    $region76: #{np_change_transition_prior.1} parent=1 // pred_region
      %122 = dma.done [#allocation6], 256
    $region77: #{np_change_transition_prior.1} parent=1 // pred_fallthru
      _
    // Predicated region
    $region78: #{np_change_transition_prior.1} parent=1 // pred_check
      _
    $region79: #{np_change_transition_prior.1} parent=1 // pred_check_branch
      %124 = sbr.rel (0) target = $region81
    $region80: #{np_change_transition_prior.1} parent=1 // pred_region
      %126 = dma.done [#allocation9], 4096
    $region81: #{np_change_transition_prior.1} parent=1 // pred_fallthru
      _
    // Predicated region
    $region82: #{np_change_transition_prior.1} parent=1 // pred_check
      _
    $region83: #{np_change_transition_prior.1} parent=1 // pred_check_branch
      %128 = sbr.rel (0) target = $region85
    $region84: #{np_change_transition_prior.1} parent=1 // pred_region
      %130 = dma.done [#allocation9], 4096
    $region85: #{np_change_transition_prior.1} parent=1 // pred_fallthru
      _
    %v132 = vld [vmem:[%s0] sm:$0xf]
    %v133 = vld [vmem:[%s0 + $0x4] sm:$0xf]
    %v134 = vld [vmem:[%s2] sm:$0xf]
    %v135 = vld [vmem:[%s3] sm:$0x1]
    %v137 = vperm.slane %v135, 0
    %v141 = vunpack.c.l.b16 %v132
    %v142 = vunpack.c.l.b16 %v133
    %v143 = vpack.c.b16 %v142, %v141
    %vm144 = vcmask 64512
    %v146 = vsel %vm144, %v143, 0
    %vm148 = vcmask 1043456
    %v150 = vsel %vm148, %v134, 0
    %152 = vmatpush.bf16.msra.mxu0 0
    %153 = vmatpush.bf16.msra.mxu0 0
    %154 = vmatpush.bf16.msra.mxu0 0
    %155 = vmatpush.bf16.msra.mxu0 0
    %156 = vmatpush.bf16.msra.mxu0 0
    %157 = vmatpush.bf16.msra.mxu0 0
    %158 = vmatpush.bf16.msra.mxu0 0
    %159 = vmatpush.bf16.msra.mxu0 %v150
    %160 = vmatmul.bf16.gmra.mxu0 %v146
    %v161 = vpop.f32.mrf.mxu0
    %v162 = vadd.f32 %v137, %v161
    %v163 = vpop.f32.mrf.mxu0
    %v164 = vadd.f32 %v137, %v163
    %165 = vdwg.mxu0
    %vm166 = vcmp.gt.f32.partialorder %v162, 0.0
    %vm167 = vcmp.gt.f32.partialorder %v164, 0.0
    %v168 = vmul.f32 %v162, 0.2
    %v169 = vmul.f32 %v164, 0.2
    %v170 = vsel %vm166, %v162, %v168
    %v171 = vsel %vm167, %v164, %v169
    %v172 = vpack.c.bf16 %v171, %v170
    %v173 = vld [vmem:[#allocation3] sm:$0xf]
    %v174 = vld [vmem:[#allocation3 + $0x4] sm:$0xf]
    %v175 = vld [vmem:[#allocation3 + $0x8] sm:$0xf]
    %v176 = vld [vmem:[#allocation3 + $0xc] sm:$0xf]
    %v177 = vld [vmem:[#allocation3 + $0x10] sm:$0xf]
    %v178 = vld [vmem:[#allocation3 + $0x14] sm:$0xf]
    %v179 = vld [vmem:[#allocation3 + $0x18] sm:$0xf]
    %v180 = vld [vmem:[#allocation3 + $0x1c] sm:$0xf]
    %v181 = vld [vmem:[%s5] sm:$0x1]
    %v183 = vperm.slane %v181, 0
    %v193 = vunpack.c.l.b16 %v173
    %v194 = vunpack.c.l.b16 %v174
    %v195 = vunpack.c.l.b16 %v175
    %v196 = vunpack.c.l.b16 %v176
    %v197 = vunpack.c.l.b16 %v177
    %v198 = vunpack.c.l.b16 %v178
    %v199 = vunpack.c.l.b16 %v179
    %v200 = vunpack.c.l.b16 %v180
    %v201 = vpack.c.b16 %v194, %v193
    %v202 = vpack.c.b16 %v196, %v195
    %v203 = vpack.c.b16 %v198, %v197
    %v204 = vpack.c.b16 %v200, %v199
    %vm209 = vcmask 523264
    %v211 = vsel %vm209, %v172, 0
    %213 = vmatpush.bf16.msra.mxu0 0
    %214 = vmatpush.bf16.msra.mxu0 0
    %215 = vmatpush.bf16.msra.mxu0 0
    %216 = vmatpush.bf16.msra.mxu0 0
    %217 = vmatpush.bf16.msra.mxu0 %v204
    %218 = vmatpush.bf16.msra.mxu0 %v203
    %219 = vmatpush.bf16.msra.mxu0 %v202
    %220 = vmatpush.bf16.msra.mxu0 %v201
    %221 = vmatmul.bf16.gmra.mxu0 %v211
    %v222 = vpop.f32.mrf.mxu0
    %v223 = vadd.f32 %v183, %v222
    %v224 = vpop.f32.mrf.mxu0
    %v225 = vadd.f32 %v183, %v224
    %226 = vdwg.mxu0
    %vm227 = vcmp.gt.f32.partialorder %v223, 0.0
    %vm228 = vcmp.gt.f32.partialorder %v225, 0.0
    %v229 = vmul.f32 %v223, 0.2
    %v230 = vmul.f32 %v225, 0.2
    %v231 = vsel %vm227, %v223, %v229
    %v232 = vsel %vm228, %v225, %v230
    %v233 = vpack.c.bf16 %v232, %v231
    %v234 = vld [vmem:[#allocation5] sm:$0xff]
    %v235 = vld [vmem:[#allocation5 + $0x8] sm:$0xff]
    %v236 = vld [vmem:[#allocation5 + $0x10] sm:$0xff]
    %v237 = vld [vmem:[#allocation5 + $0x18] sm:$0xff]
    %v238 = vld [vmem:[#allocation5 + $0x20] sm:$0xff]
    %v239 = vld [vmem:[#allocation5 + $0x28] sm:$0xff]
    %v240 = vld [vmem:[#allocation5 + $0x30] sm:$0xff]
    %v241 = vld [vmem:[#allocation5 + $0x38] sm:$0xff]
    %v242 = vld [vmem:[%s1] sm:$0xf]
    %v243 = vld [vmem:[%s1 + $0x4] sm:$0xf]
    %v244 = vld [vmem:[#allocation7] sm:$0xff]
    %v245 = vld [vmem:[#allocation7 + $0x8] sm:$0xff]
    %v248 = vunpack.c.l.b16 %v242
    %v249 = vunpack.c.l.b16 %v243
    %v250 = vpack.c.b16 %v249, %v248
    %v253 = vunpack.c.l.b16 %v244
    %v254 = vunpack.c.h.b16 %v244
    %v255 = vunpack.c.l.b16 %v245
    %v256 = vunpack.c.h.b16 %v245
    %v257 = vpack.c.b16 %v255, %v253
    %v258 = vpack.c.b16 %v256, %v254
    %vm261 = vcmask 130048
    %v263 = vsel %vm261, %v250, 0
    %265 = vmatpush.bf16.msra.mxu0 0
    %266 = vmatpush.bf16.msra.mxu0 0
    %267 = vmatpush.bf16.msra.mxu0 0
    %268 = vmatpush.bf16.msra.mxu0 0
    %269 = vmatpush.bf16.msra.mxu0 0
    %270 = vmatpush.bf16.msra.mxu0 0
    %271 = vmatpush.bf16.msra.mxu0 0
    %272 = vmatpush.bf16.msra.mxu0 %v257
    %273 = vmatmul.bf16.gmra.mxu0 %v263
    %v274 = vpop.f32.mrf.mxu0
    %v275 = vadd.f32 0.0, %v274
    %v276 = vpop.f32.mrf.mxu0
    %v277 = vadd.f32 0.0, %v276
    %278 = vdwg.mxu0
    %279 = vmatpush.bf16.msra.mxu0 0
    %280 = vmatpush.bf16.msra.mxu0 0
    %281 = vmatpush.bf16.msra.mxu0 0
    %282 = vmatpush.bf16.msra.mxu0 0
    %283 = vmatpush.bf16.msra.mxu0 0
    %284 = vmatpush.bf16.msra.mxu0 0
    %285 = vmatpush.bf16.msra.mxu0 0
    %286 = vmatpush.bf16.msra.mxu0 %v258
    %287 = vmatmul.bf16.gmra.mxu0 %v263
    %v288 = vpop.f32.mrf.mxu0
    %v289 = vadd.f32 0.0, %v288
    %v290 = vpop.f32.mrf.mxu0
    %v291 = vadd.f32 0.0, %v290
    %292 = vdwg.mxu0
    %v301 = vunpack.c.l.b16 %v234
    %v302 = vunpack.c.h.b16 %v234
    %v303 = vunpack.c.l.b16 %v235
    %v304 = vunpack.c.h.b16 %v235
    %v305 = vunpack.c.l.b16 %v236
    %v306 = vunpack.c.h.b16 %v236
    %v307 = vunpack.c.l.b16 %v237
    %v308 = vunpack.c.h.b16 %v237
    %v309 = vunpack.c.l.b16 %v238
    %v310 = vunpack.c.h.b16 %v238
    %v311 = vunpack.c.l.b16 %v239
    %v312 = vunpack.c.h.b16 %v239
    %v313 = vunpack.c.l.b16 %v240
    %v314 = vunpack.c.h.b16 %v240
    %v315 = vunpack.c.l.b16 %v241
    %v316 = vunpack.c.h.b16 %v241
    %v317 = vpack.c.b16 %v303, %v301
    %v318 = vpack.c.b16 %v304, %v302
    %v319 = vpack.c.b16 %v307, %v305
    %v320 = vpack.c.b16 %v308, %v306
    %v321 = vpack.c.b16 %v311, %v309
    %v322 = vpack.c.b16 %v312, %v310
    %v323 = vpack.c.b16 %v315, %v313
    %v324 = vpack.c.b16 %v316, %v314
    %v334 = vsel %vm209, %v233, 0
    %336 = vmatpush.bf16.msra.mxu0 0
    %337 = vmatpush.bf16.msra.mxu0 0
    %338 = vmatpush.bf16.msra.mxu0 0
    %339 = vmatpush.bf16.msra.mxu0 0
    %340 = vmatpush.bf16.msra.mxu0 %v323
    %341 = vmatpush.bf16.msra.mxu0 %v321
    %342 = vmatpush.bf16.msra.mxu0 %v319
    %343 = vmatpush.bf16.msra.mxu0 %v317
    %344 = vmatmul.bf16.gmra.mxu0 %v334
    %v345 = vpop.f32.mrf.mxu0
    %v346 = vadd.f32 %v275, %v345
    %v347 = vpop.f32.mrf.mxu0
    %v348 = vadd.f32 %v277, %v347
    %349 = vdwg.mxu0
    %350 = vmatpush.bf16.msra.mxu0 0
    %351 = vmatpush.bf16.msra.mxu0 0
    %352 = vmatpush.bf16.msra.mxu0 0
    %353 = vmatpush.bf16.msra.mxu0 0
    %354 = vmatpush.bf16.msra.mxu0 %v324
    %355 = vmatpush.bf16.msra.mxu0 %v322
    %356 = vmatpush.bf16.msra.mxu0 %v320
    %357 = vmatpush.bf16.msra.mxu0 %v318
    %358 = vmatmul.bf16.gmra.mxu0 %v334
    %v359 = vpop.f32.mrf.mxu0
    %v360 = vadd.f32 %v289, %v359
    %v361 = vpop.f32.mrf.mxu0
    %v362 = vadd.f32 %v291, %v361
    %363 = vdwg.mxu0
    %v364 = vld [vmem:[%s8] sm:$0x3]
    %v366 = vperm.slane %v364, 0
    %v367 = vperm.slane %v364, 1
    %v370 = vadd.f32 %v346, %v366
    %v371 = vadd.f32 %v360, %v367
    %v372 = vadd.f32 %v348, %v366
    %v373 = vadd.f32 %v362, %v367
    %vm374 = vcmp.gt.f32.partialorder %v370, 0.0
    %vm375 = vcmp.gt.f32.partialorder %v371, 0.0
    %vm376 = vcmp.gt.f32.partialorder %v372, 0.0
    %vm377 = vcmp.gt.f32.partialorder %v373, 0.0
    %v378 = vmul.f32 %v370, 0.2
    %v379 = vmul.f32 %v371, 0.2
    %v380 = vmul.f32 %v372, 0.2
    %v381 = vmul.f32 %v373, 0.2
    %v382 = vsel %vm374, %v370, %v378
    %v383 = vsel %vm375, %v371, %v379
    %v384 = vsel %vm376, %v372, %v380
    %v385 = vsel %vm377, %v373, %v381
    %v386 = vpack.c.bf16 %v383, %v382
    %v387 = vpack.c.bf16 %v385, %v384
    %388 = vst [vmem:[#allocation2] sm:$0xff] %v386
    %389 = vst [vmem:[#allocation2 + $0x8] sm:$0xff] %v387
    %v390 = vsel %vm374, 1.0, 0.2
    %v391 = vsel %vm375, 1.0, 0.2
    %v392 = vsel %vm376, 1.0, 0.2
    %v393 = vsel %vm377, 1.0, 0.2
    %v394 = vld [vmem:[%s9] sm:$0x3]
    %v396 = vperm.slane %v394, 0
    %v397 = vperm.slane %v394, 1
    %v400 = vmul.f32 %v390, %v396
    %v401 = vmul.f32 %v391, %v397
    %v402 = vmul.f32 %v392, %v396
    %v403 = vmul.f32 %v393, %v397
    %v404 = vpack.c.bf16 %v401, %v400
    %v405 = vpack.c.bf16 %v403, %v402
    %406 = vst [vmem:[#allocation2 + $0x10] sm:$0xff] %v404
    %407 = vst [vmem:[#allocation2 + $0x18] sm:$0xff] %v405
    %v408 = vld [vmem:[#allocation2] sm:$0xff]
    %v409 = vld [vmem:[#allocation2 + $0x8] sm:$0xff]
    %v410 = vld [vmem:[#allocation2 + $0x10] sm:$0xff]
    %v411 = vld [vmem:[#allocation2 + $0x18] sm:$0xff]
    %v412 = vld [vmem:[#allocation8] sm:$0xff]
    %v413 = vld [vmem:[#allocation8 + $0x8] sm:$0xff]
    %v414 = vld [vmem:[#allocation8 + $0x10] sm:$0xff]
    %v415 = vld [vmem:[#allocation8 + $0x18] sm:$0xff]
    %v416 = vld [vmem:[#allocation8 + $0x20] sm:$0xff]
    %v417 = vld [vmem:[#allocation8 + $0x28] sm:$0xff]
    %v418 = vld [vmem:[#allocation8 + $0x30] sm:$0xff]
    %v419 = vld [vmem:[#allocation8 + $0x38] sm:$0xff]
    %v420 = vld [vmem:[#allocation8 + $0x40] sm:$0xff]
    %v421 = vld [vmem:[#allocation8 + $0x48] sm:$0xff]
    %v422 = vld [vmem:[#allocation8 + $0x50] sm:$0xff]
    %v423 = vld [vmem:[#allocation8 + $0x58] sm:$0xff]
    %v424 = vld [vmem:[#allocation8 + $0x60] sm:$0xff]
    %v425 = vld [vmem:[#allocation8 + $0x68] sm:$0xff]
    %v426 = vld [vmem:[#allocation8 + $0x70] sm:$0xff]
    %v427 = vld [vmem:[#allocation8 + $0x78] sm:$0xff]
    %v428 = vld [vmem:[#allocation8 + $0x80] sm:$0xff]
    %v429 = vld [vmem:[#allocation8 + $0x88] sm:$0xff]
    %v430 = vld [vmem:[#allocation8 + $0x90] sm:$0xff]
    %v431 = vld [vmem:[#allocation8 + $0x98] sm:$0xff]
    %v432 = vld [vmem:[#allocation8 + $0xa0] sm:$0xff]
    %v433 = vld [vmem:[#allocation8 + $0xa8] sm:$0xff]
    %v434 = vld [vmem:[#allocation8 + $0xb0] sm:$0xff]
    %v435 = vld [vmem:[#allocation8 + $0xb8] sm:$0xff]
    %v436 = vld [vmem:[#allocation8 + $0xc0] sm:$0xff]
    %v437 = vld [vmem:[#allocation8 + $0xc8] sm:$0xff]
    %v438 = vld [vmem:[#allocation8 + $0xd0] sm:$0xff]
    %v439 = vld [vmem:[#allocation8 + $0xd8] sm:$0xff]
    %v440 = vld [vmem:[#allocation8 + $0xe0] sm:$0xff]
    %v441 = vld [vmem:[#allocation8 + $0xe8] sm:$0xff]
    %v442 = vld [vmem:[#allocation8 + $0xf0] sm:$0xff]
    %v443 = vld [vmem:[#allocation8 + $0xf8] sm:$0xff]
    %v448 = vunpack.c.l.b16 %v408
    %v449 = vunpack.c.h.b16 %v408
    %v450 = vunpack.c.l.b16 %v409
    %v451 = vunpack.c.h.b16 %v409
    %v452 = vunpack.c.l.b16 %v410
    %v453 = vunpack.c.h.b16 %v410
    %v454 = vunpack.c.l.b16 %v411
    %v455 = vunpack.c.h.b16 %v411
    %v456 = vpack.c.b16 %v450, %v448
    %v457 = vpack.c.b16 %v451, %v449
    %v458 = vpack.c.b16 %v454, %v452
    %v459 = vpack.c.b16 %v455, %v453
    %v496 = vunpack.c.l.b16 %v412
    %v497 = vunpack.c.h.b16 %v412
    %v498 = vunpack.c.l.b16 %v413
    %v499 = vunpack.c.h.b16 %v413
    %v500 = vunpack.c.l.b16 %v414
    %v501 = vunpack.c.h.b16 %v414
    %v502 = vunpack.c.l.b16 %v415
    %v503 = vunpack.c.h.b16 %v415
    %v504 = vunpack.c.l.b16 %v416
    %v505 = vunpack.c.h.b16 %v416
    %v506 = vunpack.c.l.b16 %v417
    %v507 = vunpack.c.h.b16 %v417
    %v508 = vunpack.c.l.b16 %v418
    %v509 = vunpack.c.h.b16 %v418
    %v510 = vunpack.c.l.b16 %v419
    %v511 = vunpack.c.h.b16 %v419
    %v512 = vunpack.c.l.b16 %v420
    %v513 = vunpack.c.h.b16 %v420
    %v514 = vunpack.c.l.b16 %v421
    %v515 = vunpack.c.h.b16 %v421
    %v516 = vunpack.c.l.b16 %v422
    %v517 = vunpack.c.h.b16 %v422
    %v518 = vunpack.c.l.b16 %v423
    %v519 = vunpack.c.h.b16 %v423
    %v520 = vunpack.c.l.b16 %v424
    %v521 = vunpack.c.h.b16 %v424
    %v522 = vunpack.c.l.b16 %v425
    %v523 = vunpack.c.h.b16 %v425
    %v524 = vunpack.c.l.b16 %v426
    %v525 = vunpack.c.h.b16 %v426
    %v526 = vunpack.c.l.b16 %v427
    %v527 = vunpack.c.h.b16 %v427
    %v528 = vunpack.c.l.b16 %v428
    %v529 = vunpack.c.h.b16 %v428
    %v530 = vunpack.c.l.b16 %v429
    %v531 = vunpack.c.h.b16 %v429
    %v532 = vunpack.c.l.b16 %v430
    %v533 = vunpack.c.h.b16 %v430
    %v534 = vunpack.c.l.b16 %v431
    %v535 = vunpack.c.h.b16 %v431
    %v536 = vunpack.c.l.b16 %v432
    %v537 = vunpack.c.h.b16 %v432
    %v538 = vunpack.c.l.b16 %v433
    %v539 = vunpack.c.h.b16 %v433
    %v540 = vunpack.c.l.b16 %v434
    %v541 = vunpack.c.h.b16 %v434
    %v542 = vunpack.c.l.b16 %v435
    %v543 = vunpack.c.h.b16 %v435
    %v544 = vunpack.c.l.b16 %v436
    %v545 = vunpack.c.h.b16 %v436
    %v546 = vunpack.c.l.b16 %v437
    %v547 = vunpack.c.h.b16 %v437
    %v548 = vunpack.c.l.b16 %v438
    %v549 = vunpack.c.h.b16 %v438
    %v550 = vunpack.c.l.b16 %v439
    %v551 = vunpack.c.h.b16 %v439
    %v552 = vunpack.c.l.b16 %v440
    %v553 = vunpack.c.h.b16 %v440
    %v554 = vunpack.c.l.b16 %v441
    %v555 = vunpack.c.h.b16 %v441
    %v556 = vunpack.c.l.b16 %v442
    %v557 = vunpack.c.h.b16 %v442
    %v558 = vunpack.c.l.b16 %v443
    %v559 = vunpack.c.h.b16 %v443
    %v560 = vpack.c.b16 %v498, %v496
    %v561 = vpack.c.b16 %v499, %v497
    %v562 = vpack.c.b16 %v502, %v500
    %v563 = vpack.c.b16 %v503, %v501
    %v564 = vpack.c.b16 %v506, %v504
    %v565 = vpack.c.b16 %v507, %v505
    %v566 = vpack.c.b16 %v510, %v508
    %v567 = vpack.c.b16 %v511, %v509
    %v568 = vpack.c.b16 %v514, %v512
    %v569 = vpack.c.b16 %v515, %v513
    %v570 = vpack.c.b16 %v518, %v516
    %v571 = vpack.c.b16 %v519, %v517
    %v572 = vpack.c.b16 %v522, %v520
    %v573 = vpack.c.b16 %v523, %v521
    %v574 = vpack.c.b16 %v526, %v524
    %v575 = vpack.c.b16 %v527, %v525
    %v576 = vpack.c.b16 %v530, %v528
    %v577 = vpack.c.b16 %v531, %v529
    %v578 = vpack.c.b16 %v534, %v532
    %v579 = vpack.c.b16 %v535, %v533
    %v580 = vpack.c.b16 %v538, %v536
    %v581 = vpack.c.b16 %v539, %v537
    %v582 = vpack.c.b16 %v542, %v540
    %v583 = vpack.c.b16 %v543, %v541
    %v584 = vpack.c.b16 %v546, %v544
    %v585 = vpack.c.b16 %v547, %v545
    %v586 = vpack.c.b16 %v550, %v548
    %v587 = vpack.c.b16 %v551, %v549
    %v588 = vpack.c.b16 %v554, %v552
    %v589 = vpack.c.b16 %v555, %v553
    %v590 = vpack.c.b16 %v558, %v556
    %v591 = vpack.c.b16 %v559, %v557
    %624 = vmatpush.bf16.msra.mxu0 %v574
    %625 = vmatpush.bf16.msra.mxu0 %v572
    %626 = vmatpush.bf16.msra.mxu0 %v570
    %627 = vmatpush.bf16.msra.mxu0 %v568
    %628 = vmatpush.bf16.msra.mxu0 %v566
    %629 = vmatpush.bf16.msra.mxu0 %v564
    %630 = vmatpush.bf16.msra.mxu0 %v562
    %631 = vmatpush.bf16.msra.mxu0 %v560
    %632 = vmatmul.bf16.gmra.mxu0 %v456
    %v633 = vpop.f32.mrf.mxu0
    %v634 = vadd.f32 0.0, %v633
    %v635 = vpop.f32.mrf.mxu0
    %v636 = vadd.f32 0.0, %v635
    %637 = vmatmul.bf16.gmra.mxu0 %v458
    %v638 = vpop.f32.mrf.mxu0
    %v639 = vadd.f32 0.0, %v638
    %v640 = vpop.f32.mrf.mxu0
    %v641 = vadd.f32 0.0, %v640
    %642 = vdwg.mxu0
    %643 = vmatpush.bf16.msra.mxu0 %v590
    %644 = vmatpush.bf16.msra.mxu0 %v588
    %645 = vmatpush.bf16.msra.mxu0 %v586
    %646 = vmatpush.bf16.msra.mxu0 %v584
    %647 = vmatpush.bf16.msra.mxu0 %v582
    %648 = vmatpush.bf16.msra.mxu0 %v580
    %649 = vmatpush.bf16.msra.mxu0 %v578
    %650 = vmatpush.bf16.msra.mxu0 %v576
    %651 = vmatmul.bf16.gmra.mxu0 %v457
    %v652 = vpop.f32.mrf.mxu0
    %v653 = vadd.f32 %v634, %v652
    %v654 = vpop.f32.mrf.mxu0
    %v655 = vadd.f32 %v636, %v654
    %656 = vmatmul.bf16.gmra.mxu0 %v459
    %v657 = vpop.f32.mrf.mxu0
    %v658 = vadd.f32 %v639, %v657
    %v659 = vpop.f32.mrf.mxu0
    %v660 = vadd.f32 %v641, %v659
    %661 = vdwg.mxu0
    %662 = vmatpush.bf16.msra.mxu0 %v575
    %663 = vmatpush.bf16.msra.mxu0 %v573
    %664 = vmatpush.bf16.msra.mxu0 %v571
    %665 = vmatpush.bf16.msra.mxu0 %v569
    %666 = vmatpush.bf16.msra.mxu0 %v567
    %667 = vmatpush.bf16.msra.mxu0 %v565
    %668 = vmatpush.bf16.msra.mxu0 %v563
    %669 = vmatpush.bf16.msra.mxu0 %v561
    %670 = vmatmul.bf16.gmra.mxu0 %v456
    %v671 = vpop.f32.mrf.mxu0
    %v672 = vadd.f32 0.0, %v671
    %v673 = vpop.f32.mrf.mxu0
    %v674 = vadd.f32 0.0, %v673
    %675 = vmatmul.bf16.gmra.mxu0 %v458
    %v676 = vpop.f32.mrf.mxu0
    %v677 = vadd.f32 0.0, %v676
    %v678 = vpop.f32.mrf.mxu0
    %v679 = vadd.f32 0.0, %v678
    %680 = vdwg.mxu0
    %681 = vmatpush.bf16.msra.mxu0 %v591
    %682 = vmatpush.bf16.msra.mxu0 %v589
    %683 = vmatpush.bf16.msra.mxu0 %v587
    %684 = vmatpush.bf16.msra.mxu0 %v585
    %685 = vmatpush.bf16.msra.mxu0 %v583
    %686 = vmatpush.bf16.msra.mxu0 %v581
    %687 = vmatpush.bf16.msra.mxu0 %v579
    %688 = vmatpush.bf16.msra.mxu0 %v577
    %689 = vmatmul.bf16.gmra.mxu0 %v457
    %v690 = vpop.f32.mrf.mxu0
    %v691 = vadd.f32 %v672, %v690
    %v692 = vpop.f32.mrf.mxu0
    %v693 = vadd.f32 %v674, %v692
    %694 = vmatmul.bf16.gmra.mxu0 %v459
    %v695 = vpop.f32.mrf.mxu0
    %v696 = vadd.f32 %v677, %v695
    %v697 = vpop.f32.mrf.mxu0
    %v698 = vadd.f32 %v679, %v697
    %699 = vdwg.mxu0
    %v700 = vld [vmem:[%s11] sm:$0x3]
    %v702 = vperm.slane %v700, 0
    %v703 = vperm.slane %v700, 1
    %v706 = vadd.f32 %v653, %v702
    %v707 = vadd.f32 %v691, %v703
    %v708 = vadd.f32 %v655, %v702
    %v709 = vadd.f32 %v693, %v703
    %vm710 = vcmp.gt.f32.partialorder %v706, 0.0
    %vm711 = vcmp.gt.f32.partialorder %v707, 0.0
    %vm712 = vcmp.gt.f32.partialorder %v708, 0.0
    %vm713 = vcmp.gt.f32.partialorder %v709, 0.0
    %v714 = vmul.f32 %v706, 0.2
    %v715 = vmul.f32 %v707, 0.2
    %v716 = vmul.f32 %v708, 0.2
    %v717 = vmul.f32 %v709, 0.2
    %v718 = vsel %vm710, %v706, %v714
    %v719 = vsel %vm711, %v707, %v715
    %v720 = vsel %vm712, %v708, %v716
    %v721 = vsel %vm713, %v709, %v717
    %v722 = vpack.c.bf16 %v719, %v718
    %v723 = vpack.c.bf16 %v721, %v720
    %724 = vst [vmem:[#allocation2] sm:$0xff] %v722
    %725 = vst [vmem:[#allocation2 + $0x8] sm:$0xff] %v723
    %v726 = vsel %vm710, 1.0, 0.2
    %v727 = vsel %vm711, 1.0, 0.2
    %v728 = vsel %vm712, 1.0, 0.2
    %v729 = vsel %vm713, 1.0, 0.2
    %v730 = vmul.f32 %v726, %v658
    %v731 = vmul.f32 %v727, %v696
    %v732 = vmul.f32 %v728, %v660
    %v733 = vmul.f32 %v729, %v698
    %v734 = vpack.c.bf16 %v731, %v730
    %v735 = vpack.c.bf16 %v733, %v732
    %736 = vst [vmem:[#allocation2 + $0x10] sm:$0xff] %v734
    %737 = vst [vmem:[#allocation2 + $0x18] sm:$0xff] %v735
    %v738 = vld [vmem:[#allocation2] sm:$0xff]
    %v739 = vld [vmem:[#allocation2 + $0x8] sm:$0xff]
    %v740 = vld [vmem:[#allocation2 + $0x10] sm:$0xff]
    %v741 = vld [vmem:[#allocation2 + $0x18] sm:$0xff]
    %v742 = vld [vmem:[#allocation10] sm:$0xff]
    %v743 = vld [vmem:[#allocation10 + $0x8] sm:$0xff]
    %v744 = vld [vmem:[#allocation10 + $0x10] sm:$0xff]
    %v745 = vld [vmem:[#allocation10 + $0x18] sm:$0xff]
    %v746 = vld [vmem:[#allocation10 + $0x20] sm:$0xff]
    %v747 = vld [vmem:[#allocation10 + $0x28] sm:$0xff]
    %v748 = vld [vmem:[#allocation10 + $0x30] sm:$0xff]
    %v749 = vld [vmem:[#allocation10 + $0x38] sm:$0xff]
    %v750 = vld [vmem:[#allocation10 + $0x40] sm:$0xff]
    %v751 = vld [vmem:[#allocation10 + $0x48] sm:$0xff]
    %v752 = vld [vmem:[#allocation10 + $0x50] sm:$0xff]
    %v753 = vld [vmem:[#allocation10 + $0x58] sm:$0xff]
    %v754 = vld [vmem:[#allocation10 + $0x60] sm:$0xff]
    %v755 = vld [vmem:[#allocation10 + $0x68] sm:$0xff]
    %v756 = vld [vmem:[#allocation10 + $0x70] sm:$0xff]
    %v757 = vld [vmem:[#allocation10 + $0x78] sm:$0xff]
    %v758 = vld [vmem:[#allocation10 + $0x80] sm:$0xff]
    %v759 = vld [vmem:[#allocation10 + $0x88] sm:$0xff]
    %v760 = vld [vmem:[#allocation10 + $0x90] sm:$0xff]
    %v761 = vld [vmem:[#allocation10 + $0x98] sm:$0xff]
    %v762 = vld [vmem:[#allocation10 + $0xa0] sm:$0xff]
    %v763 = vld [vmem:[#allocation10 + $0xa8] sm:$0xff]
    %v764 = vld [vmem:[#allocation10 + $0xb0] sm:$0xff]
    %v765 = vld [vmem:[#allocation10 + $0xb8] sm:$0xff]
    %v766 = vld [vmem:[#allocation10 + $0xc0] sm:$0xff]
    %v767 = vld [vmem:[#allocation10 + $0xc8] sm:$0xff]
    %v768 = vld [vmem:[#allocation10 + $0xd0] sm:$0xff]
    %v769 = vld [vmem:[#allocation10 + $0xd8] sm:$0xff]
    %v770 = vld [vmem:[#allocation10 + $0xe0] sm:$0xff]
    %v771 = vld [vmem:[#allocation10 + $0xe8] sm:$0xff]
    %v772 = vld [vmem:[#allocation10 + $0xf0] sm:$0xff]
    %v773 = vld [vmem:[#allocation10 + $0xf8] sm:$0xff]
    %v778 = vunpack.c.l.b16 %v738
    %v779 = vunpack.c.h.b16 %v738
    %v780 = vunpack.c.l.b16 %v739
    %v781 = vunpack.c.h.b16 %v739
    %v782 = vunpack.c.l.b16 %v740
    %v783 = vunpack.c.h.b16 %v740
    %v784 = vunpack.c.l.b16 %v741
    %v785 = vunpack.c.h.b16 %v741
    %v786 = vpack.c.b16 %v780, %v778
    %v787 = vpack.c.b16 %v781, %v779
    %v788 = vpack.c.b16 %v784, %v782
    %v789 = vpack.c.b16 %v785, %v783
    %v826 = vunpack.c.l.b16 %v742
    %v827 = vunpack.c.h.b16 %v742
    %v828 = vunpack.c.l.b16 %v743
    %v829 = vunpack.c.h.b16 %v743
    %v830 = vunpack.c.l.b16 %v744
    %v831 = vunpack.c.h.b16 %v744
    %v832 = vunpack.c.l.b16 %v745
    %v833 = vunpack.c.h.b16 %v745
    %v834 = vunpack.c.l.b16 %v746
    %v835 = vunpack.c.h.b16 %v746
    %v836 = vunpack.c.l.b16 %v747
    %v837 = vunpack.c.h.b16 %v747
    %v838 = vunpack.c.l.b16 %v748
    %v839 = vunpack.c.h.b16 %v748
    %v840 = vunpack.c.l.b16 %v749
    %v841 = vunpack.c.h.b16 %v749
    %v842 = vunpack.c.l.b16 %v750
    %v843 = vunpack.c.h.b16 %v750
    %v844 = vunpack.c.l.b16 %v751
    %v845 = vunpack.c.h.b16 %v751
    %v846 = vunpack.c.l.b16 %v752
    %v847 = vunpack.c.h.b16 %v752
    %v848 = vunpack.c.l.b16 %v753
    %v849 = vunpack.c.h.b16 %v753
    %v850 = vunpack.c.l.b16 %v754
    %v851 = vunpack.c.h.b16 %v754
    %v852 = vunpack.c.l.b16 %v755
    %v853 = vunpack.c.h.b16 %v755
    %v854 = vunpack.c.l.b16 %v756
    %v855 = vunpack.c.h.b16 %v756
    %v856 = vunpack.c.l.b16 %v757
    %v857 = vunpack.c.h.b16 %v757
    %v858 = vunpack.c.l.b16 %v758
    %v859 = vunpack.c.h.b16 %v758
    %v860 = vunpack.c.l.b16 %v759
    %v861 = vunpack.c.h.b16 %v759
    %v862 = vunpack.c.l.b16 %v760
    %v863 = vunpack.c.h.b16 %v760
    %v864 = vunpack.c.l.b16 %v761
    %v865 = vunpack.c.h.b16 %v761
    %v866 = vunpack.c.l.b16 %v762
    %v867 = vunpack.c.h.b16 %v762
    %v868 = vunpack.c.l.b16 %v763
    %v869 = vunpack.c.h.b16 %v763
    %v870 = vunpack.c.l.b16 %v764
    %v871 = vunpack.c.h.b16 %v764
    %v872 = vunpack.c.l.b16 %v765
    %v873 = vunpack.c.h.b16 %v765
    %v874 = vunpack.c.l.b16 %v766
    %v875 = vunpack.c.h.b16 %v766
    %v876 = vunpack.c.l.b16 %v767
    %v877 = vunpack.c.h.b16 %v767
    %v878 = vunpack.c.l.b16 %v768
    %v879 = vunpack.c.h.b16 %v768
    %v880 = vunpack.c.l.b16 %v769
    %v881 = vunpack.c.h.b16 %v769
    %v882 = vunpack.c.l.b16 %v770
    %v883 = vunpack.c.h.b16 %v770
    %v884 = vunpack.c.l.b16 %v771
    %v885 = vunpack.c.h.b16 %v771
    %v886 = vunpack.c.l.b16 %v772
    %v887 = vunpack.c.h.b16 %v772
    %v888 = vunpack.c.l.b16 %v773
    %v889 = vunpack.c.h.b16 %v773
    %v890 = vpack.c.b16 %v828, %v826
    %v891 = vpack.c.b16 %v829, %v827
    %v892 = vpack.c.b16 %v832, %v830
    %v893 = vpack.c.b16 %v833, %v831
    %v894 = vpack.c.b16 %v836, %v834
    %v895 = vpack.c.b16 %v837, %v835
    %v896 = vpack.c.b16 %v840, %v838
    %v897 = vpack.c.b16 %v841, %v839
    %v898 = vpack.c.b16 %v844, %v842
    %v899 = vpack.c.b16 %v845, %v843
    %v900 = vpack.c.b16 %v848, %v846
    %v901 = vpack.c.b16 %v849, %v847
    %v902 = vpack.c.b16 %v852, %v850
    %v903 = vpack.c.b16 %v853, %v851
    %v904 = vpack.c.b16 %v856, %v854
    %v905 = vpack.c.b16 %v857, %v855
    %v906 = vpack.c.b16 %v860, %v858
    %v907 = vpack.c.b16 %v861, %v859
    %v908 = vpack.c.b16 %v864, %v862
    %v909 = vpack.c.b16 %v865, %v863
    %v910 = vpack.c.b16 %v868, %v866
    %v911 = vpack.c.b16 %v869, %v867
    %v912 = vpack.c.b16 %v872, %v870
    %v913 = vpack.c.b16 %v873, %v871
    %v914 = vpack.c.b16 %v876, %v874
    %v915 = vpack.c.b16 %v877, %v875
    %v916 = vpack.c.b16 %v880, %v878
    %v917 = vpack.c.b16 %v881, %v879
    %v918 = vpack.c.b16 %v884, %v882
    %v919 = vpack.c.b16 %v885, %v883
    %v920 = vpack.c.b16 %v888, %v886
    %v921 = vpack.c.b16 %v889, %v887
    %954 = vmatpush.bf16.msra.mxu0 %v904
    %955 = vmatpush.bf16.msra.mxu0 %v902
    %956 = vmatpush.bf16.msra.mxu0 %v900
    %957 = vmatpush.bf16.msra.mxu0 %v898
    %958 = vmatpush.bf16.msra.mxu0 %v896
    %959 = vmatpush.bf16.msra.mxu0 %v894
    %960 = vmatpush.bf16.msra.mxu0 %v892
    %961 = vmatpush.bf16.msra.mxu0 %v890
    %962 = vmatmul.bf16.gmra.mxu0 %v786
    %v963 = vpop.f32.mrf.mxu0
    %v964 = vadd.f32 0.0, %v963
    %v965 = vpop.f32.mrf.mxu0
    %v966 = vadd.f32 0.0, %v965
    %967 = vmatmul.bf16.gmra.mxu0 %v788
    %v968 = vpop.f32.mrf.mxu0
    %v969 = vadd.f32 0.0, %v968
    %v970 = vpop.f32.mrf.mxu0
    %v971 = vadd.f32 0.0, %v970
    %972 = vdwg.mxu0
    %973 = vmatpush.bf16.msra.mxu0 %v920
    %974 = vmatpush.bf16.msra.mxu0 %v918
    %975 = vmatpush.bf16.msra.mxu0 %v916
    %976 = vmatpush.bf16.msra.mxu0 %v914
    %977 = vmatpush.bf16.msra.mxu0 %v912
    %978 = vmatpush.bf16.msra.mxu0 %v910
    %979 = vmatpush.bf16.msra.mxu0 %v908
    %980 = vmatpush.bf16.msra.mxu0 %v906
    %981 = vmatmul.bf16.gmra.mxu0 %v787
    %v982 = vpop.f32.mrf.mxu0
    %v983 = vadd.f32 %v964, %v982
    %v984 = vpop.f32.mrf.mxu0
    %v985 = vadd.f32 %v966, %v984
    %986 = vmatmul.bf16.gmra.mxu0 %v789
    %v987 = vpop.f32.mrf.mxu0
    %v988 = vadd.f32 %v969, %v987
    %v989 = vpop.f32.mrf.mxu0
    %v990 = vadd.f32 %v971, %v989
    %991 = vdwg.mxu0
    %992 = vmatpush.bf16.msra.mxu0 %v905
    %993 = vmatpush.bf16.msra.mxu0 %v903
    %994 = vmatpush.bf16.msra.mxu0 %v901
    %995 = vmatpush.bf16.msra.mxu0 %v899
    %996 = vmatpush.bf16.msra.mxu0 %v897
    %997 = vmatpush.bf16.msra.mxu0 %v895
    %998 = vmatpush.bf16.msra.mxu0 %v893
    %999 = vmatpush.bf16.msra.mxu0 %v891
    %1000 = vmatmul.bf16.gmra.mxu0 %v786
    %v1001 = vpop.f32.mrf.mxu0
    %v1002 = vadd.f32 0.0, %v1001
    %v1003 = vpop.f32.mrf.mxu0
    %v1004 = vadd.f32 0.0, %v1003
    %1005 = vmatmul.bf16.gmra.mxu0 %v788
    %v1006 = vpop.f32.mrf.mxu0
    %v1007 = vadd.f32 0.0, %v1006
    %v1008 = vpop.f32.mrf.mxu0
    %v1009 = vadd.f32 0.0, %v1008
    %1010 = vdwg.mxu0
    %1011 = vmatpush.bf16.msra.mxu0 %v921
    %1012 = vmatpush.bf16.msra.mxu0 %v919
    %1013 = vmatpush.bf16.msra.mxu0 %v917
    %1014 = vmatpush.bf16.msra.mxu0 %v915
    %1015 = vmatpush.bf16.msra.mxu0 %v913
    %1016 = vmatpush.bf16.msra.mxu0 %v911
    %1017 = vmatpush.bf16.msra.mxu0 %v909
    %1018 = vmatpush.bf16.msra.mxu0 %v907
    %1019 = vmatmul.bf16.gmra.mxu0 %v787
    %v1020 = vpop.f32.mrf.mxu0
    %v1021 = vadd.f32 %v1002, %v1020
    %v1022 = vpop.f32.mrf.mxu0
    %v1023 = vadd.f32 %v1004, %v1022
    %1024 = vmatmul.bf16.gmra.mxu0 %v789
    %v1025 = vpop.f32.mrf.mxu0
    %v1026 = vadd.f32 %v1007, %v1025
    %v1027 = vpop.f32.mrf.mxu0
    %v1028 = vadd.f32 %v1009, %v1027
    %1029 = vdwg.mxu0
    %v1030 = vld [vmem:[%s13] sm:$0x3]
    %v1032 = vperm.slane %v1030, 0
    %v1033 = vperm.slane %v1030, 1
    %v1036 = vadd.f32 %v983, %v1032
    %v1037 = vadd.f32 %v1021, %v1033
    %v1038 = vadd.f32 %v985, %v1032
    %v1039 = vadd.f32 %v1023, %v1033
    %vm1040 = vcmp.gt.f32.partialorder %v1036, 0.0
    %vm1041 = vcmp.gt.f32.partialorder %v1037, 0.0
    %vm1042 = vcmp.gt.f32.partialorder %v1038, 0.0
    %vm1043 = vcmp.gt.f32.partialorder %v1039, 0.0
    %v1044 = vmul.f32 %v1036, 0.2
    %v1045 = vmul.f32 %v1037, 0.2
    %v1046 = vmul.f32 %v1038, 0.2
    %v1047 = vmul.f32 %v1039, 0.2
    %v1048 = vsel %vm1040, %v1036, %v1044
    %v1049 = vsel %vm1041, %v1037, %v1045
    %v1050 = vsel %vm1042, %v1038, %v1046
    %v1051 = vsel %vm1043, %v1039, %v1047
    %v1052 = vpack.c.bf16 %v1049, %v1048
    %v1053 = vpack.c.bf16 %v1051, %v1050
    %1054 = vst [vmem:[#allocation2] sm:$0xff] %v1052
    %1055 = vst [vmem:[#allocation2 + $0x8] sm:$0xff] %v1053
    %v1056 = vsel %vm1040, 1.0, 0.2
    %v1057 = vsel %vm1041, 1.0, 0.2
    %v1058 = vsel %vm1042, 1.0, 0.2
    %v1059 = vsel %vm1043, 1.0, 0.2
    %v1060 = vmul.f32 %v1056, %v988
    %v1061 = vmul.f32 %v1057, %v1026
    %v1062 = vmul.f32 %v1058, %v990
    %v1063 = vmul.f32 %v1059, %v1028
    %v1064 = vpack.c.bf16 %v1061, %v1060
    %v1065 = vpack.c.bf16 %v1063, %v1062
    %1066 = vst [vmem:[#allocation2 + $0x10] sm:$0xff] %v1064
    %1067 = vst [vmem:[#allocation2 + $0x18] sm:$0xff] %v1065
    %v1068 = vld [vmem:[#allocation2] sm:$0xff]
    %v1069 = vld [vmem:[#allocation2 + $0x8] sm:$0xff]
    %v1070 = vld [vmem:[#allocation2 + $0x10] sm:$0xff]
    %v1071 = vld [vmem:[#allocation2 + $0x18] sm:$0xff]
    %v1072 = vld [vmem:[%s14] sm:$0xf]
    %v1073 = vld [vmem:[%s14 + $0x4] sm:$0xf]
    %v1074 = vld [vmem:[%s14 + $0x8] sm:$0xf]
    %v1075 = vld [vmem:[%s14 + $0xc] sm:$0xf]
    %v1076 = vld [vmem:[%s14 + $0x10] sm:$0xf]
    %v1077 = vld [vmem:[%s14 + $0x14] sm:$0xf]
    %v1078 = vld [vmem:[%s14 + $0x18] sm:$0xf]
    %v1079 = vld [vmem:[%s14 + $0x1c] sm:$0xf]
    %v1080 = vld [vmem:[%s14 + $0x20] sm:$0xf]
    %v1081 = vld [vmem:[%s14 + $0x24] sm:$0xf]
    %v1082 = vld [vmem:[%s14 + $0x28] sm:$0xf]
    %v1083 = vld [vmem:[%s14 + $0x2c] sm:$0xf]
    %v1084 = vld [vmem:[%s14 + $0x30] sm:$0xf]
    %v1085 = vld [vmem:[%s14 + $0x34] sm:$0xf]
    %v1086 = vld [vmem:[%s14 + $0x38] sm:$0xf]
    %v1087 = vld [vmem:[%s14 + $0x3c] sm:$0xf]
    %v1088 = vld [vmem:[%s14 + $0x40] sm:$0xf]
    %v1089 = vld [vmem:[%s14 + $0x44] sm:$0xf]
    %v1090 = vld [vmem:[%s14 + $0x48] sm:$0xf]
    %v1091 = vld [vmem:[%s14 + $0x4c] sm:$0xf]
    %v1092 = vld [vmem:[%s14 + $0x50] sm:$0xf]
    %v1093 = vld [vmem:[%s14 + $0x54] sm:$0xf]
    %v1094 = vld [vmem:[%s14 + $0x58] sm:$0xf]
    %v1095 = vld [vmem:[%s14 + $0x5c] sm:$0xf]
    %v1096 = vld [vmem:[%s14 + $0x60] sm:$0xf]
    %v1097 = vld [vmem:[%s14 + $0x64] sm:$0xf]
    %v1098 = vld [vmem:[%s14 + $0x68] sm:$0xf]
    %v1099 = vld [vmem:[%s14 + $0x6c] sm:$0xf]
    %v1100 = vld [vmem:[%s14 + $0x70] sm:$0xf]
    %v1101 = vld [vmem:[%s14 + $0x74] sm:$0xf]
    %v1102 = vld [vmem:[%s14 + $0x78] sm:$0xf]
    %v1103 = vld [vmem:[%s14 + $0x7c] sm:$0xf]
    %v1108 = vunpack.c.l.b16 %v1068
    %v1109 = vunpack.c.h.b16 %v1068
    %v1110 = vunpack.c.l.b16 %v1069
    %v1111 = vunpack.c.h.b16 %v1069
    %v1112 = vunpack.c.l.b16 %v1070
    %v1113 = vunpack.c.h.b16 %v1070
    %v1114 = vunpack.c.l.b16 %v1071
    %v1115 = vunpack.c.h.b16 %v1071
    %v1116 = vpack.c.b16 %v1110, %v1108
    %v1117 = vpack.c.b16 %v1111, %v1109
    %v1118 = vpack.c.b16 %v1114, %v1112
    %v1119 = vpack.c.b16 %v1115, %v1113
    %v1156 = vunpack.c.l.b16 %v1072
    %v1157 = vunpack.c.l.b16 %v1073
    %v1158 = vunpack.c.l.b16 %v1074
    %v1159 = vunpack.c.l.b16 %v1075
    %v1160 = vunpack.c.l.b16 %v1076
    %v1161 = vunpack.c.l.b16 %v1077
    %v1162 = vunpack.c.l.b16 %v1078
    %v1163 = vunpack.c.l.b16 %v1079
    %v1164 = vunpack.c.l.b16 %v1080
    %v1165 = vunpack.c.l.b16 %v1081
    %v1166 = vunpack.c.l.b16 %v1082
    %v1167 = vunpack.c.l.b16 %v1083
    %v1168 = vunpack.c.l.b16 %v1084
    %v1169 = vunpack.c.l.b16 %v1085
    %v1170 = vunpack.c.l.b16 %v1086
    %v1171 = vunpack.c.l.b16 %v1087
    %v1172 = vunpack.c.l.b16 %v1088
    %v1173 = vunpack.c.l.b16 %v1089
    %v1174 = vunpack.c.l.b16 %v1090
    %v1175 = vunpack.c.l.b16 %v1091
    %v1176 = vunpack.c.l.b16 %v1092
    %v1177 = vunpack.c.l.b16 %v1093
    %v1178 = vunpack.c.l.b16 %v1094
    %v1179 = vunpack.c.l.b16 %v1095
    %v1180 = vunpack.c.l.b16 %v1096
    %v1181 = vunpack.c.l.b16 %v1097
    %v1182 = vunpack.c.l.b16 %v1098
    %v1183 = vunpack.c.l.b16 %v1099
    %v1184 = vunpack.c.l.b16 %v1100
    %v1185 = vunpack.c.l.b16 %v1101
    %v1186 = vunpack.c.l.b16 %v1102
    %v1187 = vunpack.c.l.b16 %v1103
    %v1188 = vpack.c.b16 %v1157, %v1156
    %v1189 = vpack.c.b16 %v1159, %v1158
    %v1190 = vpack.c.b16 %v1161, %v1160
    %v1191 = vpack.c.b16 %v1163, %v1162
    %v1192 = vpack.c.b16 %v1165, %v1164
    %v1193 = vpack.c.b16 %v1167, %v1166
    %v1194 = vpack.c.b16 %v1169, %v1168
    %v1195 = vpack.c.b16 %v1171, %v1170
    %v1196 = vpack.c.b16 %v1173, %v1172
    %v1197 = vpack.c.b16 %v1175, %v1174
    %v1198 = vpack.c.b16 %v1177, %v1176
    %v1199 = vpack.c.b16 %v1179, %v1178
    %v1200 = vpack.c.b16 %v1181, %v1180
    %v1201 = vpack.c.b16 %v1183, %v1182
    %v1202 = vpack.c.b16 %v1185, %v1184
    %v1203 = vpack.c.b16 %v1187, %v1186
    %1220 = vmatpush.bf16.msra.mxu0 %v1195
    %1221 = vmatpush.bf16.msra.mxu0 %v1194
    %1222 = vmatpush.bf16.msra.mxu0 %v1193
    %1223 = vmatpush.bf16.msra.mxu0 %v1192
    %1224 = vmatpush.bf16.msra.mxu0 %v1191
    %1225 = vmatpush.bf16.msra.mxu0 %v1190
    %1226 = vmatpush.bf16.msra.mxu0 %v1189
    %1227 = vmatpush.bf16.msra.mxu0 %v1188
    %1228 = vmatmul.bf16.gmra.mxu0 %v1116
    %v1229 = vpop.f32.mrf.mxu0
    %v1230 = vadd.f32 0.0, %v1229
    %v1231 = vpop.f32.mrf.mxu0
    %v1232 = vadd.f32 0.0, %v1231
    %1233 = vmatmul.bf16.gmra.mxu0 %v1118
    %v1234 = vpop.f32.mrf.mxu0
    %v1235 = vadd.f32 0.0, %v1234
    %v1236 = vpop.f32.mrf.mxu0
    %v1237 = vadd.f32 0.0, %v1236
    %1238 = vdwg.mxu0
    %1239 = vmatpush.bf16.msra.mxu0 %v1203
    %1240 = vmatpush.bf16.msra.mxu0 %v1202
    %1241 = vmatpush.bf16.msra.mxu0 %v1201
    %1242 = vmatpush.bf16.msra.mxu0 %v1200
    %1243 = vmatpush.bf16.msra.mxu0 %v1199
    %1244 = vmatpush.bf16.msra.mxu0 %v1198
    %1245 = vmatpush.bf16.msra.mxu0 %v1197
    %1246 = vmatpush.bf16.msra.mxu0 %v1196
    %1247 = vmatmul.bf16.gmra.mxu0 %v1117
    %v1248 = vpop.f32.mrf.mxu0
    %v1249 = vadd.f32 %v1230, %v1248
    %v1250 = vpop.f32.mrf.mxu0
    %v1251 = vadd.f32 %v1232, %v1250
    %1252 = vmatmul.bf16.gmra.mxu0 %v1119
    %v1253 = vpop.f32.mrf.mxu0
    %v1254 = vadd.f32 %v1235, %v1253
    %v1255 = vpop.f32.mrf.mxu0
    %v1256 = vadd.f32 %v1237, %v1255
    %1257 = vdwg.mxu0
    %v1258 = vld [vmem:[%s15] sm:$0x1]
    %v1260 = vperm.slane %v1258, 0
    %v1262 = vadd.f32 %v1249, %v1260
    %v1263 = vadd.f32 %v1251, %v1260
    %v1264 = vlaneseq
    %v1265 = vand.u32 %v1264, 127
    %vm1266 = vcmp.lt.s32.totalorder %v1265, 4
    %v1267 = vand.u32 2147483647, %v1254
    %v1268 = vand.u32 2147483647, %v1256
    %v1269 = vmax.f32 %v1267, 1e-30
    %v1270 = vmax.f32 %v1268, 1e-30
    %v1271 = vlog2.pop %v1269
    %v1272 = vmul.f32 %v1271, 0.6931472
    %v1273 = vlog2.pop %v1270
    %v1274 = vmul.f32 %v1273, 0.6931472
    %v1275 = vsel %vm1266, %v1272, 0.0
    %v1276 = vsel %vm1266, %v1274, 0.0
    %1277 = vadd.xlane.f32.xlu0 %v1275
    %v1278 = vpop.xlane.xlu0 %1277
    %1279 = vadd.xlane.f32.xlu0 %v1276
    %v1280 = vpop.xlane.xlu0 %1279
    %v1281 = vsel %vm1266, %v1262, 0.0
    %v1282 = vsel %vm1266, %v1263, 0.0
    %vm1283 = vcmp.eq.s32.totalorder %v1265, 4
    %v1284 = vsel %vm1283, %v1278, %v1281
    %v1285 = vsel %vm1283, %v1280, %v1282
    %v1286 = vlaneseq
    %v1287 = vshrl.u32 %v1286, 7
    %v1288 = vadd.s32 %v1287, 8
    %s1289 = smul.u32 0, 16
    %v1290 = vstv %s1289
    %v1291 = vadd.s32 %v1287, %v1290
    %v1292 = vadd.s32 %v1288, %v1290
    %vm1293 = vcmp.lt.s32.totalorder %v1291, 16
    %vm1294 = vcmp.lt.s32.totalorder %v1292, 16
    %v1295 = vsel %vm1293, %v1284, 0.0
    %v1296 = vsel %vm1294, %v1285, 0.0
    %v1297 = vpack.c.bf16 %v1295, %v1295
    %v1298 = vpack.c.bf16 %v1296, %v1296
    %1299 = vst [vmem:[%s16] sm:$0xf] %v1297
    %1300 = vst [vmem:[%s16 + $0x4] sm:$0xf] %v1298
    // Predicated region
    $region86: #{np_change_transition_prior.1} parent=1 // pred_check
      _
    $region87: #{np_change_transition_prior.1} parent=1 // pred_check_branch
      %1302 = sbr.rel (0) target = $region89
    $region88: #{np_change_transition_prior.1} parent=1 // pred_region
      _
    $region89: #{np_change_transition_prior.1} parent=1 // pred_fallthru
      _
    // Predicated region
    $region90: #{np_change_transition_prior.1} parent=1 // pred_check
      _
    $region91: #{np_change_transition_prior.1} parent=1 // pred_check_branch
      %1304 = sbr.rel (0) target = $region93
    $region92: #{np_change_transition_prior.1} parent=1 // pred_region
      _
    $region93: #{np_change_transition_prior.1} parent=1 // pred_fallthru
      _
    %1305 = vsyncpa [#allocation4], 1
    %1306 = vsyncpa [#allocation6], 1
    %1307 = vsyncpa [#allocation9], 1

</llo_original>
